<compile_context>
chip_gen: v7x
topology: tpu7x:2x2x1
jax: 0.10.0
libtpu: 0.0.40
codegen_flags: <defaults>
</compile_context>

<pallas_src>
from functools import partial

import jax
import jax.numpy as jnp
from jax import lax
from jax.experimental import pallas as pl
from jax.experimental.pallas import tpu as pltpu

EPS = 1e-5
_INV_SQRT2 = 0.7071067811865476


def _gelu_exact(t):
    return 0.5 * t * (1.0 + lax.erf(t * _INV_SQRT2))


def _bn_train(t, gamma_col, beta_col, inv_count):
    """Training-mode BatchNorm on (N, C, P): per-channel stats over (N, P), one pass."""
    s = jnp.sum(jnp.sum(t, axis=2, keepdims=True), axis=0, keepdims=True)       # (1,C,1)
    ss = jnp.sum(jnp.sum(t * t, axis=2, keepdims=True), axis=0, keepdims=True)  # (1,C,1)
    mean = s * inv_count
    var = ss * inv_count - mean * mean          # biased variance (matches BN train mode)
    inv_std = lax.rsqrt(var + EPS)
    return (t - mean) * (inv_std * gamma_col[None]) + beta_col[None]


def _normal_block_kernel(n_batch, hh, ww,
                         x_ref, w1_ref, b1_ref, w2_ref, b2_ref,
                         w3a_ref, w3b_ref, b3_ref, g4_ref, be4_ref,
                         wdw_ref, b4_ref, g3_ref, be3_ref,
                         out_ref, z_ref):
    p_len = hh * ww
    inv_cnt = 1.0 / float(n_batch * p_len)

    # ---- conv1 / conv2 / conv3 (bn1, bn2 are Identity) --------------------------
    # Per-sample MXU matmuls over the full lane-dense spatial axis, written directly
    # into a persistent VMEM scratch slice.
    for bi in range(n_batch):
        x_b = x_ref[bi]                                                   # (C, P)
        y1 = jnp.dot(w1_ref[...], x_b, preferred_element_type=jnp.float32) + b1_ref[...]
        y2 = jnp.dot(w2_ref[...], x_b, preferred_element_type=jnp.float32) + b2_ref[...]
        z_ref[bi] = (jnp.dot(w3a_ref[...], y1, preferred_element_type=jnp.float32)
                     + jnp.dot(w3b_ref[...], y2, preferred_element_type=jnp.float32)
                     + b3_ref[...])                                       # (C, P)

    z = z_ref[...]                                                        # (N, C, P)

    # ---- bn4 (batch stats) + GELU ----------------------------------------------
    z = _gelu_exact(_bn_train(z, g4_ref[...], be4_ref[...], inv_cnt))

    # ---- conv4: depthwise 3x3, padding=1, computed on the flat H*W lane axis ----
    col = lax.broadcasted_iota(jnp.int32, z.shape, 2)                     # flat spatial idx
    if (ww & (ww - 1)) == 0:
        wcoord = jnp.bitwise_and(col, ww - 1)                             # col % ww
    else:
        wcoord = col - (col // ww) * ww

    acc = jnp.zeros_like(z)
    for ki in range(3):
        for kj in range(3):
            di, dj = ki - 1, kj - 1
            off = di * ww + dj
            if off == 0:
                tap = z
            else:
                # tap[..., p] = z[..., (p + off) mod P]; wrapped entries masked below.
                tap = jnp.concatenate([z[:, :, off:], z[:, :, :off]], axis=2)
            conds = []
            if di < 0:
                conds.append(col >= ww)                 # row h-1 exists
            if di > 0:
                conds.append(col < (hh - 1) * ww)       # row h+1 exists
            if dj < 0:
                conds.append(wcoord >= 1)               # column w-1 exists
            if dj > 0:
                conds.append(wcoord < ww - 1)           # column w+1 exists
            if conds:
                valid = conds[0]
                for c_ in conds[1:]:
                    valid = valid & c_
                tap = jnp.where(valid, tap, 0.0)
            acc = acc + wdw_ref[ki * 3 + kj][None] * tap                  # (1,C,1)*(N,C,P)
    acc = acc + b4_ref[...][None]

    # ---- bn3 (batch stats) + residual shortcut + GELU ---------------------------
    y = _bn_train(acc, g3_ref[...], be3_ref[...], inv_cnt)
    out_ref[...] = _gelu_exact(y + x_ref[...])


def normal_block_forward(x, p):
    n, c, h, w = x.shape
    m = p["w1"].shape[0]
    assert p["w3"].shape == (c, 2 * m)
    p_len = h * w

    x_flat = x.reshape(n, c, p_len)                   # contiguous NCHW -> free reshape
    w3a, w3b = p["w3"][:, :m], p["w3"][:, m:]
    col = lambda v: v.reshape(-1, 1)                  # per-channel params as (K, 1) columns
    wdw = p["w4"].reshape(c, 9).T.reshape(9, c, 1)    # (C,1,3,3) -> (9, C, 1); idx = ki*3+kj

    vspec = pl.BlockSpec(memory_space=pltpu.MemorySpace.VMEM)
    out_flat = pl.pallas_call(
        partial(_normal_block_kernel, n, h, w),
        out_shape=jax.ShapeDtypeStruct((n, c, p_len), jnp.float32),
        in_specs=[vspec] * 14,
        out_specs=vspec,
        scratch_shapes=[pltpu.VMEM((n, c, p_len), jnp.float32)],
    )(x_flat,
      p["w1"], col(p["b1"]), p["w2"], col(p["b2"]),
      w3a, w3b, col(p["b3"]), col(p["g4"]), col(p["be4"]),
      wdw, col(p["b4"]), col(p["g3"]), col(p["be3"]))

    return out_flat.reshape(n, c, h, w)


# ---------------------------------------------------------------------------------
# Pure-JAX reference (same semantics) for the correctness check.
# ---------------------------------------------------------------------------------
def reference(x, p):
    hi = lax.Precision.HIGHEST
    n, c, h, w = x.shape

    def bn(t, g, b):
        mu = jnp.mean(t, axis=(0, 2, 3), keepdims=True)
        var = jnp.mean((t - mu) ** 2, axis=(0, 2, 3), keepdims=True)
        return (t - mu) / jnp.sqrt(var + EPS) * g[None, :, None, None] + b[None, :, None, None]

    def gelu(t):
        return 0.5 * t * (1.0 + lax.erf(t / jnp.sqrt(2.0)))

    y1 = jnp.einsum("mc,nchw->nmhw", p["w1"], x, precision=hi) + p["b1"][None, :, None, None]
    y2 = jnp.einsum("mc,nchw->nmhw", p["w2"], x, precision=hi) + p["b2"][None, :, None, None]
    y = jnp.concatenate([y1, y2], axis=1)
    z = jnp.einsum("ck,nkhw->nchw", p["w3"], y, precision=hi) + p["b3"][None, :, None, None]
    z = gelu(bn(z, p["g4"], p["be4"]))
    dw = lax.conv_general_dilated(
        z, p["w4"], window_strides=(1, 1), padding=((1, 1), (1, 1)),
        dimension_numbers=("NCHW", "OIHW", "NCHW"),
        feature_group_count=c, precision=hi) + p["b4"][None, :, None, None]
    return gelu(bn(dw, p["g3"], p["be3"]) + x)


if __name__ == "__main__":
    key = jax.random.PRNGKey(0)
    N, C, M, S = 2, 8, 16, 16                     # batch, in_ch, middle_ch, spatial
    ks = jax.random.split(key, 13)

    params = dict(
        w1=jax.random.normal(ks[0], (M, C), jnp.float32) * 0.2,
        b1=jax.random.normal(ks[1], (M,), jnp.float32) * 0.1,
        w2=jax.random.normal(ks[2], (M, C), jnp.float32) * 0.2,
        b2=jax.random.normal(ks[3], (M,), jnp.float32) * 0.1,
        w3=jax.random.normal(ks[4], (C, 2 * M), jnp.float32) * 0.2,
        b3=jax.random.normal(ks[5], (C,), jnp.float32) * 0.1,
        w4=jax.random.normal(ks[6], (C, 1, 3, 3), jnp.float32) * 0.2,   # depthwise 3x3
        b4=jax.random.normal(ks[7], (C,), jnp.float32) * 0.1,
        g4=1.0 + 0.1 * jax.random.normal(ks[8], (C,), jnp.float32),
        be4=0.1 * jax.random.normal(ks[9], (C,), jnp.float32),
        g3=1.0 + 0.1 * jax.random.normal(ks[10], (C,), jnp.float32),
        be3=0.1 * jax.random.normal(ks[11], (C,), jnp.float32),
    )
    x = jax.random.normal(ks[12], (N, C, S, S), jnp.float32)

    out = jax.block_until_ready(normal_block_forward(x, params))
    ref = reference(x, params)
    assert out.shape == (N, C, S, S)
    err = float(jnp.max(jnp.abs(out - ref)))
    if not err < 2e-3:
        raise SystemExit(f"mismatch: max abs err = {err}")
    print("KERNEL_OK")
</pallas_src>

<mosaic_0001>
module attributes {stable_mosaic.version = 11 : i64} {
  func.func @_normal_block_kernel(%arg0: memref<2x8x256xf32, #tpu.memory_space<vmem>>, %arg1: memref<16x8xf32, #tpu.memory_space<vmem>>, %arg2: memref<16x1xf32, #tpu.memory_space<vmem>>, %arg3: memref<16x8xf32, #tpu.memory_space<vmem>>, %arg4: memref<16x1xf32, #tpu.memory_space<vmem>>, %arg5: memref<8x16xf32, #tpu.memory_space<vmem>>, %arg6: memref<8x16xf32, #tpu.memory_space<vmem>>, %arg7: memref<8x1xf32, #tpu.memory_space<vmem>>, %arg8: memref<8x1xf32, #tpu.memory_space<vmem>>, %arg9: memref<8x1xf32, #tpu.memory_space<vmem>>, %arg10: memref<9x8x1xf32, #tpu.memory_space<vmem>>, %arg11: memref<8x1xf32, #tpu.memory_space<vmem>>, %arg12: memref<8x1xf32, #tpu.memory_space<vmem>>, %arg13: memref<8x1xf32, #tpu.memory_space<vmem>>, %arg14: memref<2x8x256xf32, #tpu.memory_space<vmem>>, %arg15: memref<2x8x256xf32, #tpu.memory_space<vmem>>) attributes {dimension_semantics = [], scalar_prefetch = 0 : i64, scratch_operands = 1 : i64, tpu.core_type = #tpu.core_type<tc>} {
    %c0 = arith.constant 0 : index
    %c0_0 = arith.constant 0 : index
    %c0_1 = arith.constant 0 : index
    %0 = vector.load %arg0[%c0, %c0_0, %c0_1] : memref<2x8x256xf32, #tpu.memory_space<vmem>>, vector<1x8x256xf32>
    %1 = vector.shape_cast %0 : vector<1x8x256xf32> to vector<8x256xf32>
    %c0_2 = arith.constant 0 : index
    %c0_3 = arith.constant 0 : index
    %2 = vector.load %arg1[%c0_2, %c0_3] : memref<16x8xf32, #tpu.memory_space<vmem>>, vector<16x8xf32>
    %cst = arith.constant dense<0.000000e+00> : vector<16x256xf32>
    %3 = tpu.matmul %2, %1, %cst {dimension_numbers = #tpu.dot_dimension_numbers<[1], [0], [0], [1], [0, 0, 1, 1], [], []>} : vector<16x8xf32>, vector<8x256xf32>, vector<16x256xf32> -> vector<16x256xf32>
    %c0_4 = arith.constant 0 : index
    %c0_5 = arith.constant 0 : index
    %4 = vector.load %arg2[%c0_4, %c0_5] : memref<16x1xf32, #tpu.memory_space<vmem>>, vector<16x1xf32>
    %5 = vector.broadcast %4 : vector<16x1xf32> to vector<16x256xf32>
    %6 = arith.addf %3, %5 : vector<16x256xf32>
    %c0_6 = arith.constant 0 : index
    %c0_7 = arith.constant 0 : index
    %7 = vector.load %arg3[%c0_6, %c0_7] : memref<16x8xf32, #tpu.memory_space<vmem>>, vector<16x8xf32>
    %cst_8 = arith.constant dense<0.000000e+00> : vector<16x256xf32>
    %8 = tpu.matmul %7, %1, %cst_8 {dimension_numbers = #tpu.dot_dimension_numbers<[1], [0], [0], [1], [0, 0, 1, 1], [], []>} : vector<16x8xf32>, vector<8x256xf32>, vector<16x256xf32> -> vector<16x256xf32>
    %c0_9 = arith.constant 0 : index
    %c0_10 = arith.constant 0 : index
    %9 = vector.load %arg4[%c0_9, %c0_10] : memref<16x1xf32, #tpu.memory_space<vmem>>, vector<16x1xf32>
    %10 = vector.broadcast %9 : vector<16x1xf32> to vector<16x256xf32>
    %11 = arith.addf %8, %10 : vector<16x256xf32>
    %c0_11 = arith.constant 0 : index
    %c0_12 = arith.constant 0 : index
    %12 = vector.load %arg5[%c0_11, %c0_12] : memref<8x16xf32, #tpu.memory_space<vmem>>, vector<8x16xf32>
    %cst_13 = arith.constant dense<0.000000e+00> : vector<8x256xf32>
    %13 = tpu.matmul %12, %6, %cst_13 {dimension_numbers = #tpu.dot_dimension_numbers<[1], [0], [0], [1], [0, 0, 1, 1], [], []>} : vector<8x16xf32>, vector<16x256xf32>, vector<8x256xf32> -> vector<8x256xf32>
    %c0_14 = arith.constant 0 : index
    %c0_15 = arith.constant 0 : index
    %14 = vector.load %arg6[%c0_14, %c0_15] : memref<8x16xf32, #tpu.memory_space<vmem>>, vector<8x16xf32>
    %cst_16 = arith.constant dense<0.000000e+00> : vector<8x256xf32>
    %15 = tpu.matmul %14, %11, %cst_16 {dimension_numbers = #tpu.dot_dimension_numbers<[1], [0], [0], [1], [0, 0, 1, 1], [], []>} : vector<8x16xf32>, vector<16x256xf32>, vector<8x256xf32> -> vector<8x256xf32>
    %16 = arith.addf %13, %15 : vector<8x256xf32>
    %c0_17 = arith.constant 0 : index
    %c0_18 = arith.constant 0 : index
    %17 = vector.load %arg7[%c0_17, %c0_18] : memref<8x1xf32, #tpu.memory_space<vmem>>, vector<8x1xf32>
    %18 = vector.broadcast %17 : vector<8x1xf32> to vector<8x256xf32>
    %19 = arith.addf %16, %18 : vector<8x256xf32>
    %c0_19 = arith.constant 0 : index
    %c0_20 = arith.constant 0 : index
    %c0_21 = arith.constant 0 : index
    %20 = vector.load %arg15[%c0_19, %c0_20, %c0_21] : memref<2x8x256xf32, #tpu.memory_space<vmem>>, vector<1x8x256xf32>
    %21 = vector.shape_cast %20 : vector<1x8x256xf32> to vector<8x256xf32>
    %22 = vector.shape_cast %19 : vector<8x256xf32> to vector<1x8x256xf32>
    tpu.vector_store %arg15[%c0_19, %c0_20, %c0_21], %22 {strides = array<i32>} : memref<2x8x256xf32, #tpu.memory_space<vmem>>, vector<1x8x256xf32>,
    %c1 = arith.constant 1 : index
    %c0_22 = arith.constant 0 : index
    %c0_23 = arith.constant 0 : index
    %23 = vector.load %arg0[%c1, %c0_22, %c0_23] : memref<2x8x256xf32, #tpu.memory_space<vmem>>, vector<1x8x256xf32>
    %24 = vector.shape_cast %23 : vector<1x8x256xf32> to vector<8x256xf32>
    %c0_24 = arith.constant 0 : index
    %c0_25 = arith.constant 0 : index
    %25 = vector.load %arg1[%c0_24, %c0_25] : memref<16x8xf32, #tpu.memory_space<vmem>>, vector<16x8xf32>
    %cst_26 = arith.constant dense<0.000000e+00> : vector<16x256xf32>
    %26 = tpu.matmul %25, %24, %cst_26 {dimension_numbers = #tpu.dot_dimension_numbers<[1], [0], [0], [1], [0, 0, 1, 1], [], []>} : vector<16x8xf32>, vector<8x256xf32>, vector<16x256xf32> -> vector<16x256xf32>
    %c0_27 = arith.constant 0 : index
    %c0_28 = arith.constant 0 : index
    %27 = vector.load %arg2[%c0_27, %c0_28] : memref<16x1xf32, #tpu.memory_space<vmem>>, vector<16x1xf32>
    %28 = vector.broadcast %27 : vector<16x1xf32> to vector<16x256xf32>
    %29 = arith.addf %26, %28 : vector<16x256xf32>
    %c0_29 = arith.constant 0 : index
    %c0_30 = arith.constant 0 : index
    %30 = vector.load %arg3[%c0_29, %c0_30] : memref<16x8xf32, #tpu.memory_space<vmem>>, vector<16x8xf32>
    %cst_31 = arith.constant dense<0.000000e+00> : vector<16x256xf32>
    %31 = tpu.matmul %30, %24, %cst_31 {dimension_numbers = #tpu.dot_dimension_numbers<[1], [0], [0], [1], [0, 0, 1, 1], [], []>} : vector<16x8xf32>, vector<8x256xf32>, vector<16x256xf32> -> vector<16x256xf32>
    %c0_32 = arith.constant 0 : index
    %c0_33 = arith.constant 0 : index
    %32 = vector.load %arg4[%c0_32, %c0_33] : memref<16x1xf32, #tpu.memory_space<vmem>>, vector<16x1xf32>
    %33 = vector.broadcast %32 : vector<16x1xf32> to vector<16x256xf32>
    %34 = arith.addf %31, %33 : vector<16x256xf32>
    %c0_34 = arith.constant 0 : index
    %c0_35 = arith.constant 0 : index
    %35 = vector.load %arg5[%c0_34, %c0_35] : memref<8x16xf32, #tpu.memory_space<vmem>>, vector<8x16xf32>
    %cst_36 = arith.constant dense<0.000000e+00> : vector<8x256xf32>
    %36 = tpu.matmul %35, %29, %cst_36 {dimension_numbers = #tpu.dot_dimension_numbers<[1], [0], [0], [1], [0, 0, 1, 1], [], []>} : vector<8x16xf32>, vector<16x256xf32>, vector<8x256xf32> -> vector<8x256xf32>
    %c0_37 = arith.constant 0 : index
    %c0_38 = arith.constant 0 : index
    %37 = vector.load %arg6[%c0_37, %c0_38] : memref<8x16xf32, #tpu.memory_space<vmem>>, vector<8x16xf32>
    %cst_39 = arith.constant dense<0.000000e+00> : vector<8x256xf32>
    %38 = tpu.matmul %37, %34, %cst_39 {dimension_numbers = #tpu.dot_dimension_numbers<[1], [0], [0], [1], [0, 0, 1, 1], [], []>} : vector<8x16xf32>, vector<16x256xf32>, vector<8x256xf32> -> vector<8x256xf32>
    %39 = arith.addf %36, %38 : vector<8x256xf32>
    %c0_40 = arith.constant 0 : index
    %c0_41 = arith.constant 0 : index
    %40 = vector.load %arg7[%c0_40, %c0_41] : memref<8x1xf32, #tpu.memory_space<vmem>>, vector<8x1xf32>
    %41 = vector.broadcast %40 : vector<8x1xf32> to vector<8x256xf32>
    %42 = arith.addf %39, %41 : vector<8x256xf32>
    %c1_42 = arith.constant 1 : index
    %c0_43 = arith.constant 0 : index
    %c0_44 = arith.constant 0 : index
    %43 = vector.load %arg15[%c1_42, %c0_43, %c0_44] : memref<2x8x256xf32, #tpu.memory_space<vmem>>, vector<1x8x256xf32>
    %44 = vector.shape_cast %43 : vector<1x8x256xf32> to vector<8x256xf32>
    %45 = vector.shape_cast %42 : vector<8x256xf32> to vector<1x8x256xf32>
    tpu.vector_store %arg15[%c1_42, %c0_43, %c0_44], %45 {strides = array<i32>} : memref<2x8x256xf32, #tpu.memory_space<vmem>>, vector<1x8x256xf32>,
    %c0_45 = arith.constant 0 : index
    %c0_46 = arith.constant 0 : index
    %c0_47 = arith.constant 0 : index
    %46 = vector.load %arg15[%c0_45, %c0_46, %c0_47] : memref<2x8x256xf32, #tpu.memory_space<vmem>>, vector<2x8x256xf32>
    %c0_48 = arith.constant 0 : index
    %c0_49 = arith.constant 0 : index
    %47 = vector.load %arg8[%c0_48, %c0_49] : memref<8x1xf32, #tpu.memory_space<vmem>>, vector<8x1xf32>
    %c0_50 = arith.constant 0 : index
    %c0_51 = arith.constant 0 : index
    %48 = vector.load %arg9[%c0_50, %c0_51] : memref<8x1xf32, #tpu.memory_space<vmem>>, vector<8x1xf32>
    %cst_52 = arith.constant dense<0.000000e+00> : vector<2x8xf32>
    %49 = vector.multi_reduction <add>, %46, %cst_52 [2] : vector<2x8x256xf32> to vector<2x8xf32>
    %50 = vector.shape_cast %49 : vector<2x8xf32> to vector<2x8x1xf32>
    %cst_53 = arith.constant dense<0.000000e+00> : vector<8x1xf32>
    %51 = vector.multi_reduction <add>, %50, %cst_53 [0] : vector<2x8x1xf32> to vector<8x1xf32>
    %52 = vector.shape_cast %51 : vector<8x1xf32> to vector<1x8x1xf32>
    %53 = arith.mulf %46, %46 : vector<2x8x256xf32>
    %cst_54 = arith.constant dense<0.000000e+00> : vector<2x8xf32>
    %54 = vector.multi_reduction <add>, %53, %cst_54 [2] : vector<2x8x256xf32> to vector<2x8xf32>
    %55 = vector.shape_cast %54 : vector<2x8xf32> to vector<2x8x1xf32>
    %cst_55 = arith.constant dense<0.000000e+00> : vector<8x1xf32>
    %56 = vector.multi_reduction <add>, %55, %cst_55 [0] : vector<2x8x1xf32> to vector<8x1xf32>
    %57 = vector.shape_cast %56 : vector<8x1xf32> to vector<1x8x1xf32>
    %cst_56 = arith.constant 0.001953125 : f32
    %58 = vector.broadcast %cst_56 : f32 to vector<1x8x1xf32>
    %59 = arith.mulf %52, %58 : vector<1x8x1xf32>
    %cst_57 = arith.constant 0.001953125 : f32
    %60 = vector.broadcast %cst_57 : f32 to vector<1x8x1xf32>
    %61 = arith.mulf %57, %60 : vector<1x8x1xf32>
    %62 = arith.mulf %59, %59 : vector<1x8x1xf32>
    %63 = arith.subf %61, %62 : vector<1x8x1xf32>
    %cst_58 = arith.constant 9.99999974E-6 : f32
    %64 = vector.broadcast %cst_58 : f32 to vector<1x8x1xf32>
    %65 = arith.addf %63, %64 : vector<1x8x1xf32>
    %66 = math.rsqrt %65 : vector<1x8x1xf32>
    %67 = vector.broadcast %59 : vector<1x8x1xf32> to vector<2x8x256xf32>
    %68 = arith.subf %46, %67 : vector<2x8x256xf32>
    %69 = vector.shape_cast %47 : vector<8x1xf32> to vector<1x8x1xf32>
    %70 = arith.mulf %66, %69 : vector<1x8x1xf32>
    %71 = vector.broadcast %70 : vector<1x8x1xf32> to vector<2x8x256xf32>
    %72 = arith.mulf %68, %71 : vector<2x8x256xf32>
    %73 = vector.shape_cast %48 : vector<8x1xf32> to vector<1x8x1xf32>
    %74 = vector.broadcast %73 : vector<1x8x1xf32> to vector<2x8x256xf32>
    %75 = arith.addf %72, %74 : vector<2x8x256xf32>
    %cst_59 = arith.constant 5.000000e-01 : f32
    %76 = vector.broadcast %cst_59 : f32 to vector<2x8x256xf32>
    %77 = arith.mulf %76, %75 : vector<2x8x256xf32>
    %cst_60 = arith.constant 0.707106769 : f32
    %78 = vector.broadcast %cst_60 : f32 to vector<2x8x256xf32>
    %79 = arith.mulf %75, %78 : vector<2x8x256xf32>
    %80 = math.erf %79 : vector<2x8x256xf32>
    %cst_61 = arith.constant 1.000000e+00 : f32
    %81 = vector.broadcast %cst_61 : f32 to vector<2x8x256xf32>
    %82 = arith.addf %81, %80 : vector<2x8x256xf32>
    %83 = arith.mulf %77, %82 : vector<2x8x256xf32>
    %84 = tpu.iota {dimensions = array<i32: 2>} : vector<2x8x256xi32>
    %c15_i32 = arith.constant 15 : i32
    %85 = vector.broadcast %c15_i32 : i32 to vector<2x8x256xi32>
    %86 = arith.andi %84, %85 : vector<2x8x256xi32>
    %cst_62 = arith.constant 0.000000e+00 : f32
    %87 = vector.broadcast %cst_62 : f32 to vector<2x8x256xf32>
    %88 = vector.extract_strided_slice %83 {offsets = [0, 0, 239], sizes = [2, 8, 17], strides = [1, 1, 1]} : vector<2x8x256xf32> to vector<2x8x17xf32>
    %89 = vector.extract_strided_slice %83 {offsets = [0, 0, 0], sizes = [2, 8, 239], strides = [1, 1, 1]} : vector<2x8x256xf32> to vector<2x8x239xf32>
    %90 = tpu.concatenate %88, %89 in 2 : vector<2x8x17xf32>, vector<2x8x239xf32> -> vector<2x8x256xf32>
    %c16_i32 = arith.constant 16 : i32
    %91 = vector.broadcast %c16_i32 : i32 to vector<2x8x256xi32>
    %92 = arith.cmpi sge, %84, %91 : vector<2x8x256xi32>
    %c1_i32 = arith.constant 1 : i32
    %93 = vector.broadcast %c1_i32 : i32 to vector<2x8x256xi32>
    %94 = arith.cmpi sge, %86, %93 : vector<2x8x256xi32>
    %95 = arith.andi %92, %94 : vector<2x8x256xi1>
    %cst_63 = arith.constant 0.000000e+00 : f32
    %96 = vector.broadcast %cst_63 : f32 to vector<2x8x256xf32>
    %97 = arith.select %95, %90, %96 : vector<2x8x256xi1>, vector<2x8x256xf32>
    %c0_64 = arith.constant 0 : index
    %c0_65 = arith.constant 0 : index
    %c0_66 = arith.constant 0 : index
    %98 = vector.load %arg10[%c0_64, %c0_65, %c0_66] : memref<9x8x1xf32, #tpu.memory_space<vmem>>, vector<1x8x1xf32>
    %99 = vector.shape_cast %98 : vector<1x8x1xf32> to vector<8x1xf32>
    %100 = vector.shape_cast %99 : vector<8x1xf32> to vector<1x8x1xf32>
    %101 = vector.broadcast %100 : vector<1x8x1xf32> to vector<2x8x256xf32>
    %102 = arith.mulf %101, %97 : vector<2x8x256xf32>
    %103 = arith.addf %87, %102 : vector<2x8x256xf32>
    %104 = vector.extract_strided_slice %83 {offsets = [0, 0, 240], sizes = [2, 8, 16], strides = [1, 1, 1]} : vector<2x8x256xf32> to vector<2x8x16xf32>
    %105 = vector.extract_strided_slice %83 {offsets = [0, 0, 0], sizes = [2, 8, 240], strides = [1, 1, 1]} : vector<2x8x256xf32> to vector<2x8x240xf32>
    %106 = tpu.concatenate %104, %105 in 2 : vector<2x8x16xf32>, vector<2x8x240xf32> -> vector<2x8x256xf32>
    %c16_i32_67 = arith.constant 16 : i32
    %107 = vector.broadcast %c16_i32_67 : i32 to vector<2x8x256xi32>
    %108 = arith.cmpi sge, %84, %107 : vector<2x8x256xi32>
    %cst_68 = arith.constant 0.000000e+00 : f32
    %109 = vector.broadcast %cst_68 : f32 to vector<2x8x256xf32>
    %110 = arith.select %108, %106, %109 : vector<2x8x256xi1>, vector<2x8x256xf32>
    %c1_69 = arith.constant 1 : index
    %c0_70 = arith.constant 0 : index
    %c0_71 = arith.constant 0 : index
    %111 = vector.load %arg10[%c1_69, %c0_70, %c0_71] : memref<9x8x1xf32, #tpu.memory_space<vmem>>, vector<1x8x1xf32>
    %112 = vector.shape_cast %111 : vector<1x8x1xf32> to vector<8x1xf32>
    %113 = vector.shape_cast %112 : vector<8x1xf32> to vector<1x8x1xf32>
    %114 = vector.broadcast %113 : vector<1x8x1xf32> to vector<2x8x256xf32>
    %115 = arith.mulf %114, %110 : vector<2x8x256xf32>
    %116 = arith.addf %103, %115 : vector<2x8x256xf32>
    %117 = vector.extract_strided_slice %83 {offsets = [0, 0, 241], sizes = [2, 8, 15], strides = [1, 1, 1]} : vector<2x8x256xf32> to vector<2x8x15xf32>
    %118 = vector.extract_strided_slice %83 {offsets = [0, 0, 0], sizes = [2, 8, 241], strides = [1, 1, 1]} : vector<2x8x256xf32> to vector<2x8x241xf32>
    %119 = tpu.concatenate %117, %118 in 2 : vector<2x8x15xf32>, vector<2x8x241xf32> -> vector<2x8x256xf32>
    %c16_i32_72 = arith.constant 16 : i32
    %120 = vector.broadcast %c16_i32_72 : i32 to vector<2x8x256xi32>
    %121 = arith.cmpi sge, %84, %120 : vector<2x8x256xi32>
    %c15_i32_73 = arith.constant 15 : i32
    %122 = vector.broadcast %c15_i32_73 : i32 to vector<2x8x256xi32>
    %123 = arith.cmpi slt, %86, %122 : vector<2x8x256xi32>
    %124 = arith.andi %121, %123 : vector<2x8x256xi1>
    %cst_74 = arith.constant 0.000000e+00 : f32
    %125 = vector.broadcast %cst_74 : f32 to vector<2x8x256xf32>
    %126 = arith.select %124, %119, %125 : vector<2x8x256xi1>, vector<2x8x256xf32>
    %c2 = arith.constant 2 : index
    %c0_75 = arith.constant 0 : index
    %c0_76 = arith.constant 0 : index
    %127 = vector.load %arg10[%c2, %c0_75, %c0_76] : memref<9x8x1xf32, #tpu.memory_space<vmem>>, vector<1x8x1xf32>
    %128 = vector.shape_cast %127 : vector<1x8x1xf32> to vector<8x1xf32>
    %129 = vector.shape_cast %128 : vector<8x1xf32> to vector<1x8x1xf32>
    %130 = vector.broadcast %129 : vector<1x8x1xf32> to vector<2x8x256xf32>
    %131 = arith.mulf %130, %126 : vector<2x8x256xf32>
    %132 = arith.addf %116, %131 : vector<2x8x256xf32>
    %133 = vector.extract_strided_slice %83 {offsets = [0, 0, 255], sizes = [2, 8, 1], strides = [1, 1, 1]} : vector<2x8x256xf32> to vector<2x8x1xf32>
    %134 = vector.extract_strided_slice %83 {offsets = [0, 0, 0], sizes = [2, 8, 255], strides = [1, 1, 1]} : vector<2x8x256xf32> to vector<2x8x255xf32>
    %135 = tpu.concatenate %133, %134 in 2 : vector<2x8x1xf32>, vector<2x8x255xf32> -> vector<2x8x256xf32>
    %c1_i32_77 = arith.constant 1 : i32
    %136 = vector.broadcast %c1_i32_77 : i32 to vector<2x8x256xi32>
    %137 = arith.cmpi sge, %86, %136 : vector<2x8x256xi32>
    %cst_78 = arith.constant 0.000000e+00 : f32
    %138 = vector.broadcast %cst_78 : f32 to vector<2x8x256xf32>
    %139 = arith.select %137, %135, %138 : vector<2x8x256xi1>, vector<2x8x256xf32>
    %c3 = arith.constant 3 : index
    %c0_79 = arith.constant 0 : index
    %c0_80 = arith.constant 0 : index
    %140 = vector.load %arg10[%c3, %c0_79, %c0_80] : memref<9x8x1xf32, #tpu.memory_space<vmem>>, vector<1x8x1xf32>
    %141 = vector.shape_cast %140 : vector<1x8x1xf32> to vector<8x1xf32>
    %142 = vector.shape_cast %141 : vector<8x1xf32> to vector<1x8x1xf32>
    %143 = vector.broadcast %142 : vector<1x8x1xf32> to vector<2x8x256xf32>
    %144 = arith.mulf %143, %139 : vector<2x8x256xf32>
    %145 = arith.addf %132, %144 : vector<2x8x256xf32>
    %c4 = arith.constant 4 : index
    %c0_81 = arith.constant 0 : index
    %c0_82 = arith.constant 0 : index
    %146 = vector.load %arg10[%c4, %c0_81, %c0_82] : memref<9x8x1xf32, #tpu.memory_space<vmem>>, vector<1x8x1xf32>
    %147 = vector.shape_cast %146 : vector<1x8x1xf32> to vector<8x1xf32>
    %148 = vector.shape_cast %147 : vector<8x1xf32> to vector<1x8x1xf32>
    %149 = vector.broadcast %148 : vector<1x8x1xf32> to vector<2x8x256xf32>
    %150 = arith.mulf %149, %83 : vector<2x8x256xf32>
    %151 = arith.addf %145, %150 : vector<2x8x256xf32>
    %152 = vector.extract_strided_slice %83 {offsets = [0, 0, 1], sizes = [2, 8, 255], strides = [1, 1, 1]} : vector<2x8x256xf32> to vector<2x8x255xf32>
    %153 = vector.extract_strided_slice %83 {offsets = [0, 0, 0], sizes = [2, 8, 1], strides = [1, 1, 1]} : vector<2x8x256xf32> to vector<2x8x1xf32>
    %154 = tpu.concatenate %152, %153 in 2 : vector<2x8x255xf32>, vector<2x8x1xf32> -> vector<2x8x256xf32>
    %c15_i32_83 = arith.constant 15 : i32
    %155 = vector.broadcast %c15_i32_83 : i32 to vector<2x8x256xi32>
    %156 = arith.cmpi slt, %86, %155 : vector<2x8x256xi32>
    %cst_84 = arith.constant 0.000000e+00 : f32
    %157 = vector.broadcast %cst_84 : f32 to vector<2x8x256xf32>
    %158 = arith.select %156, %154, %157 : vector<2x8x256xi1>, vector<2x8x256xf32>
    %c5 = arith.constant 5 : index
    %c0_85 = arith.constant 0 : index
    %c0_86 = arith.constant 0 : index
    %159 = vector.load %arg10[%c5, %c0_85, %c0_86] : memref<9x8x1xf32, #tpu.memory_space<vmem>>, vector<1x8x1xf32>
    %160 = vector.shape_cast %159 : vector<1x8x1xf32> to vector<8x1xf32>
    %161 = vector.shape_cast %160 : vector<8x1xf32> to vector<1x8x1xf32>
    %162 = vector.broadcast %161 : vector<1x8x1xf32> to vector<2x8x256xf32>
    %163 = arith.mulf %162, %158 : vector<2x8x256xf32>
    %164 = arith.addf %151, %163 : vector<2x8x256xf32>
    %165 = vector.extract_strided_slice %83 {offsets = [0, 0, 15], sizes = [2, 8, 241], strides = [1, 1, 1]} : vector<2x8x256xf32> to vector<2x8x241xf32>
    %166 = vector.extract_strided_slice %83 {offsets = [0, 0, 0], sizes = [2, 8, 15], strides = [1, 1, 1]} : vector<2x8x256xf32> to vector<2x8x15xf32>
    %167 = tpu.concatenate %165, %166 in 2 : vector<2x8x241xf32>, vector<2x8x15xf32> -> vector<2x8x256xf32>
    %c240_i32 = arith.constant 240 : i32
    %168 = vector.broadcast %c240_i32 : i32 to vector<2x8x256xi32>
    %169 = arith.cmpi slt, %84, %168 : vector<2x8x256xi32>
    %c1_i32_87 = arith.constant 1 : i32
    %170 = vector.broadcast %c1_i32_87 : i32 to vector<2x8x256xi32>
    %171 = arith.cmpi sge, %86, %170 : vector<2x8x256xi32>
    %172 = arith.andi %169, %171 : vector<2x8x256xi1>
    %cst_88 = arith.constant 0.000000e+00 : f32
    %173 = vector.broadcast %cst_88 : f32 to vector<2x8x256xf32>
    %174 = arith.select %172, %167, %173 : vector<2x8x256xi1>, vector<2x8x256xf32>
    %c6 = arith.constant 6 : index
    %c0_89 = arith.constant 0 : index
    %c0_90 = arith.constant 0 : index
    %175 = vector.load %arg10[%c6, %c0_89, %c0_90] : memref<9x8x1xf32, #tpu.memory_space<vmem>>, vector<1x8x1xf32>
    %176 = vector.shape_cast %175 : vector<1x8x1xf32> to vector<8x1xf32>
    %177 = vector.shape_cast %176 : vector<8x1xf32> to vector<1x8x1xf32>
    %178 = vector.broadcast %177 : vector<1x8x1xf32> to vector<2x8x256xf32>
    %179 = arith.mulf %178, %174 : vector<2x8x256xf32>
    %180 = arith.addf %164, %179 : vector<2x8x256xf32>
    %181 = vector.extract_strided_slice %83 {offsets = [0, 0, 16], sizes = [2, 8, 240], strides = [1, 1, 1]} : vector<2x8x256xf32> to vector<2x8x240xf32>
    %182 = vector.extract_strided_slice %83 {offsets = [0, 0, 0], sizes = [2, 8, 16], strides = [1, 1, 1]} : vector<2x8x256xf32> to vector<2x8x16xf32>
    %183 = tpu.concatenate %181, %182 in 2 : vector<2x8x240xf32>, vector<2x8x16xf32> -> vector<2x8x256xf32>
    %c240_i32_91 = arith.constant 240 : i32
    %184 = vector.broadcast %c240_i32_91 : i32 to vector<2x8x256xi32>
    %185 = arith.cmpi slt, %84, %184 : vector<2x8x256xi32>
    %cst_92 = arith.constant 0.000000e+00 : f32
    %186 = vector.broadcast %cst_92 : f32 to vector<2x8x256xf32>
    %187 = arith.select %185, %183, %186 : vector<2x8x256xi1>, vector<2x8x256xf32>
    %c7 = arith.constant 7 : index
    %c0_93 = arith.constant 0 : index
    %c0_94 = arith.constant 0 : index
    %188 = vector.load %arg10[%c7, %c0_93, %c0_94] : memref<9x8x1xf32, #tpu.memory_space<vmem>>, vector<1x8x1xf32>
    %189 = vector.shape_cast %188 : vector<1x8x1xf32> to vector<8x1xf32>
    %190 = vector.shape_cast %189 : vector<8x1xf32> to vector<1x8x1xf32>
    %191 = vector.broadcast %190 : vector<1x8x1xf32> to vector<2x8x256xf32>
    %192 = arith.mulf %191, %187 : vector<2x8x256xf32>
    %193 = arith.addf %180, %192 : vector<2x8x256xf32>
    %194 = vector.extract_strided_slice %83 {offsets = [0, 0, 17], sizes = [2, 8, 239], strides = [1, 1, 1]} : vector<2x8x256xf32> to vector<2x8x239xf32>
    %195 = vector.extract_strided_slice %83 {offsets = [0, 0, 0], sizes = [2, 8, 17], strides = [1, 1, 1]} : vector<2x8x256xf32> to vector<2x8x17xf32>
    %196 = tpu.concatenate %194, %195 in 2 : vector<2x8x239xf32>, vector<2x8x17xf32> -> vector<2x8x256xf32>
    %c240_i32_95 = arith.constant 240 : i32
    %197 = vector.broadcast %c240_i32_95 : i32 to vector<2x8x256xi32>
    %198 = arith.cmpi slt, %84, %197 : vector<2x8x256xi32>
    %c15_i32_96 = arith.constant 15 : i32
    %199 = vector.broadcast %c15_i32_96 : i32 to vector<2x8x256xi32>
    %200 = arith.cmpi slt, %86, %199 : vector<2x8x256xi32>
    %201 = arith.andi %198, %200 : vector<2x8x256xi1>
    %cst_97 = arith.constant 0.000000e+00 : f32
    %202 = vector.broadcast %cst_97 : f32 to vector<2x8x256xf32>
    %203 = arith.select %201, %196, %202 : vector<2x8x256xi1>, vector<2x8x256xf32>
    %c8 = arith.constant 8 : index
    %c0_98 = arith.constant 0 : index
    %c0_99 = arith.constant 0 : index
    %204 = vector.load %arg10[%c8, %c0_98, %c0_99] : memref<9x8x1xf32, #tpu.memory_space<vmem>>, vector<1x8x1xf32>
    %205 = vector.shape_cast %204 : vector<1x8x1xf32> to vector<8x1xf32>
    %206 = vector.shape_cast %205 : vector<8x1xf32> to vector<1x8x1xf32>
    %207 = vector.broadcast %206 : vector<1x8x1xf32> to vector<2x8x256xf32>
    %208 = arith.mulf %207, %203 : vector<2x8x256xf32>
    %209 = arith.addf %193, %208 : vector<2x8x256xf32>
    %c0_100 = arith.constant 0 : index
    %c0_101 = arith.constant 0 : index
    %210 = vector.load %arg11[%c0_100, %c0_101] : memref<8x1xf32, #tpu.memory_space<vmem>>, vector<8x1xf32>
    %211 = vector.shape_cast %210 : vector<8x1xf32> to vector<1x8x1xf32>
    %212 = vector.broadcast %211 : vector<1x8x1xf32> to vector<2x8x256xf32>
    %213 = arith.addf %209, %212 : vector<2x8x256xf32>
    %c0_102 = arith.constant 0 : index
    %c0_103 = arith.constant 0 : index
    %214 = vector.load %arg12[%c0_102, %c0_103] : memref<8x1xf32, #tpu.memory_space<vmem>>, vector<8x1xf32>
    %c0_104 = arith.constant 0 : index
    %c0_105 = arith.constant 0 : index
    %215 = vector.load %arg13[%c0_104, %c0_105] : memref<8x1xf32, #tpu.memory_space<vmem>>, vector<8x1xf32>
    %cst_106 = arith.constant dense<0.000000e+00> : vector<2x8xf32>
    %216 = vector.multi_reduction <add>, %213, %cst_106 [2] : vector<2x8x256xf32> to vector<2x8xf32>
    %217 = vector.shape_cast %216 : vector<2x8xf32> to vector<2x8x1xf32>
    %cst_107 = arith.constant dense<0.000000e+00> : vector<8x1xf32>
    %218 = vector.multi_reduction <add>, %217, %cst_107 [0] : vector<2x8x1xf32> to vector<8x1xf32>
    %219 = vector.shape_cast %218 : vector<8x1xf32> to vector<1x8x1xf32>
    %220 = arith.mulf %213, %213 : vector<2x8x256xf32>
    %cst_108 = arith.constant dense<0.000000e+00> : vector<2x8xf32>
    %221 = vector.multi_reduction <add>, %220, %cst_108 [2] : vector<2x8x256xf32> to vector<2x8xf32>
    %222 = vector.shape_cast %221 : vector<2x8xf32> to vector<2x8x1xf32>
    %cst_109 = arith.constant dense<0.000000e+00> : vector<8x1xf32>
    %223 = vector.multi_reduction <add>, %222, %cst_109 [0] : vector<2x8x1xf32> to vector<8x1xf32>
    %224 = vector.shape_cast %223 : vector<8x1xf32> to vector<1x8x1xf32>
    %cst_110 = arith.constant 0.001953125 : f32
    %225 = vector.broadcast %cst_110 : f32 to vector<1x8x1xf32>
    %226 = arith.mulf %219, %225 : vector<1x8x1xf32>
    %cst_111 = arith.constant 0.001953125 : f32
    %227 = vector.broadcast %cst_111 : f32 to vector<1x8x1xf32>
    %228 = arith.mulf %224, %227 : vector<1x8x1xf32>
    %229 = arith.mulf %226, %226 : vector<1x8x1xf32>
    %230 = arith.subf %228, %229 : vector<1x8x1xf32>
    %cst_112 = arith.constant 9.99999974E-6 : f32
    %231 = vector.broadcast %cst_112 : f32 to vector<1x8x1xf32>
    %232 = arith.addf %230, %231 : vector<1x8x1xf32>
    %233 = math.rsqrt %232 : vector<1x8x1xf32>
    %234 = vector.broadcast %226 : vector<1x8x1xf32> to vector<2x8x256xf32>
    %235 = arith.subf %213, %234 : vector<2x8x256xf32>
    %236 = vector.shape_cast %214 : vector<8x1xf32> to vector<1x8x1xf32>
    %237 = arith.mulf %233, %236 : vector<1x8x1xf32>
    %238 = vector.broadcast %237 : vector<1x8x1xf32> to vector<2x8x256xf32>
    %239 = arith.mulf %235, %238 : vector<2x8x256xf32>
    %240 = vector.shape_cast %215 : vector<8x1xf32> to vector<1x8x1xf32>
    %241 = vector.broadcast %240 : vector<1x8x1xf32> to vector<2x8x256xf32>
    %242 = arith.addf %239, %241 : vector<2x8x256xf32>
    %c0_113 = arith.constant 0 : index
    %c0_114 = arith.constant 0 : index
    %c0_115 = arith.constant 0 : index
    %243 = vector.load %arg0[%c0_113, %c0_114, %c0_115] : memref<2x8x256xf32, #tpu.memory_space<vmem>>, vector<2x8x256xf32>
    %244 = arith.addf %242, %243 : vector<2x8x256xf32>
    %cst_116 = arith.constant 5.000000e-01 : f32
    %245 = vector.broadcast %cst_116 : f32 to vector<2x8x256xf32>
    %246 = arith.mulf %245, %244 : vector<2x8x256xf32>
    %cst_117 = arith.constant 0.707106769 : f32
    %247 = vector.broadcast %cst_117 : f32 to vector<2x8x256xf32>
    %248 = arith.mulf %244, %247 : vector<2x8x256xf32>
    %249 = math.erf %248 : vector<2x8x256xf32>
    %cst_118 = arith.constant 1.000000e+00 : f32
    %250 = vector.broadcast %cst_118 : f32 to vector<2x8x256xf32>
    %251 = arith.addf %250, %249 : vector<2x8x256xf32>
    %252 = arith.mulf %246, %251 : vector<2x8x256xf32>
    %c0_119 = arith.constant 0 : index
    %c0_120 = arith.constant 0 : index
    %c0_121 = arith.constant 0 : index
    %253 = vector.load %arg14[%c0_119, %c0_120, %c0_121] : memref<2x8x256xf32, #tpu.memory_space<vmem>>, vector<2x8x256xf32>
    tpu.vector_store %arg14[%c0_119, %c0_120, %c0_121], %252 {strides = array<i32>} : memref<2x8x256xf32, #tpu.memory_space<vmem>>, vector<2x8x256xf32>,
    return
  }
}

</mosaic_0001>

<llo_original>
// kernel: tpu_custom_call.1
$region0: #{tpu_custom_call.1}
  #allocation0 [shape = 'u32[]', space=smem, size = 0x4, offset = 0x4, fixed_abs, tag = 'smem constant byte address 0x4 - core index']
  #allocation1 [shape = 'u32[144,128]{1,0:T(1,128)}', space=vmem, size = 0x12000, scoped, tag = 'internal scratch']
  #allocation2 [shape = 'f32[2,8,256]{2,1,0:T(8,128)}', space=vmem, size = 0x4000, scoped, tag = 'scratch operand']
  %s0 = inlined_call_operand.vmem [shape: f32[2,8,256], index: 0, kind: input, shape index: {}]
  %s1 = inlined_call_operand.vmem [shape: f32[16,8], index: 1, kind: input, shape index: {}]
  %s2 = inlined_call_operand.vmem [shape: f32[16,1], index: 2, kind: input, shape index: {}]
  %s3 = inlined_call_operand.vmem [shape: f32[16,8], index: 3, kind: input, shape index: {}]
  %s4 = inlined_call_operand.vmem [shape: f32[16,1], index: 4, kind: input, shape index: {}]
  %s5 = inlined_call_operand.vmem [shape: f32[8,16], index: 5, kind: input, shape index: {}]
  %s6 = inlined_call_operand.vmem [shape: f32[8,16], index: 6, kind: input, shape index: {}]
  %s7 = inlined_call_operand.vmem [shape: f32[8,1], index: 7, kind: input, shape index: {}]
  %s8 = inlined_call_operand.vmem [shape: f32[8,1], index: 8, kind: input, shape index: {}]
  %s9 = inlined_call_operand.vmem [shape: f32[8,1], index: 9, kind: input, shape index: {}]
  %s10 = inlined_call_operand.vmem [shape: f32[9,8,1], index: 10, kind: input, shape index: {}]
  %s11 = inlined_call_operand.vmem [shape: f32[8,1], index: 11, kind: input, shape index: {}]
  %s12 = inlined_call_operand.vmem [shape: f32[8,1], index: 12, kind: input, shape index: {}]
  %s13 = inlined_call_operand.vmem [shape: f32[8,1], index: 13, kind: input, shape index: {}]
  %s14 = inlined_call_operand.hbm [shape: f32[2,8,256], index: 14, kind: output, shape index: {}]
  %s15 = sld [smem:[#allocation0]]
  $region66: #{tpu_custom_call.1} parent=0
    _
  %s17 = ssub.s32 1, %s15
  %s18 = scalar_select 0, %s17, %s15
  $region1: #{tpu_custom_call.1} parent=0
    #allocation3 [shape = 'u8[16384]{0}', space=vmem, size = 0x4000, scoped, tag = 'output window, operand 0, single buffered']
    #allocation4 [shape = 's32[1]{0}', space=sflag, size = 0x4, scoped, tag = 'scoped memory for tpu_custom_call.1']
    %19 = vsyncpa [#allocation4], 0
    // Predicated region
    $region2: #{tpu_custom_call.1} parent=1 // pred_check
      _
    $region3: #{tpu_custom_call.1} parent=1 // pred_check_branch
      %21 = sbr.rel (0) target = $region5
    $region4: #{tpu_custom_call.1} parent=1 // pred_region
      _
    $region5: #{tpu_custom_call.1} parent=1 // pred_fallthru
      _
    // Predicated region
    $region6: #{tpu_custom_call.1} parent=1 // pred_check
      _
    $region7: #{tpu_custom_call.1} parent=1 // pred_check_branch
      %23 = sbr.rel (0) target = $region9
    $region8: #{tpu_custom_call.1} parent=1 // pred_region
      _
    $region9: #{tpu_custom_call.1} parent=1 // pred_fallthru
      _
    // Predicated region
    $region10: #{tpu_custom_call.1} parent=1 // pred_check
      _
    $region11: #{tpu_custom_call.1} parent=1 // pred_check_branch
      %25 = sbr.rel (0) target = $region13
    $region12: #{tpu_custom_call.1} parent=1 // pred_region
      _
    $region13: #{tpu_custom_call.1} parent=1 // pred_fallthru
      _
    // Predicated region
    $region14: #{tpu_custom_call.1} parent=1 // pred_check
      _
    $region15: #{tpu_custom_call.1} parent=1 // pred_check_branch
      %27 = sbr.rel (0) target = $region17
    $region16: #{tpu_custom_call.1} parent=1 // pred_region
      _
    $region17: #{tpu_custom_call.1} parent=1 // pred_fallthru
      _
    // Predicated region
    $region18: #{tpu_custom_call.1} parent=1 // pred_check
      _
    $region19: #{tpu_custom_call.1} parent=1 // pred_check_branch
      %29 = sbr.rel (0) target = $region21
    $region20: #{tpu_custom_call.1} parent=1 // pred_region
      _
    $region21: #{tpu_custom_call.1} parent=1 // pred_fallthru
      _
    // Predicated region
    $region22: #{tpu_custom_call.1} parent=1 // pred_check
      _
    $region23: #{tpu_custom_call.1} parent=1 // pred_check_branch
      %31 = sbr.rel (0) target = $region25
    $region24: #{tpu_custom_call.1} parent=1 // pred_region
      _
    $region25: #{tpu_custom_call.1} parent=1 // pred_fallthru
      _
    // Predicated region
    $region26: #{tpu_custom_call.1} parent=1 // pred_check
      _
    $region27: #{tpu_custom_call.1} parent=1 // pred_check_branch
      %33 = sbr.rel (0) target = $region29
    $region28: #{tpu_custom_call.1} parent=1 // pred_region
      _
    $region29: #{tpu_custom_call.1} parent=1 // pred_fallthru
      _
    // Predicated region
    $region30: #{tpu_custom_call.1} parent=1 // pred_check
      _
    $region31: #{tpu_custom_call.1} parent=1 // pred_check_branch
      %35 = sbr.rel (0) target = $region33
    $region32: #{tpu_custom_call.1} parent=1 // pred_region
      _
    $region33: #{tpu_custom_call.1} parent=1 // pred_fallthru
      _
    // Predicated region
    $region34: #{tpu_custom_call.1} parent=1 // pred_check
      _
    $region35: #{tpu_custom_call.1} parent=1 // pred_check_branch
      %37 = sbr.rel (0) target = $region37
    $region36: #{tpu_custom_call.1} parent=1 // pred_region
      _
    $region37: #{tpu_custom_call.1} parent=1 // pred_fallthru
      _
    // Predicated region
    $region38: #{tpu_custom_call.1} parent=1 // pred_check
      _
    $region39: #{tpu_custom_call.1} parent=1 // pred_check_branch
      %39 = sbr.rel (0) target = $region41
    $region40: #{tpu_custom_call.1} parent=1 // pred_region
      _
    $region41: #{tpu_custom_call.1} parent=1 // pred_fallthru
      _
    // Predicated region
    $region42: #{tpu_custom_call.1} parent=1 // pred_check
      _
    $region43: #{tpu_custom_call.1} parent=1 // pred_check_branch
      %41 = sbr.rel (0) target = $region45
    $region44: #{tpu_custom_call.1} parent=1 // pred_region
      _
    $region45: #{tpu_custom_call.1} parent=1 // pred_fallthru
      _
    // Predicated region
    $region46: #{tpu_custom_call.1} parent=1 // pred_check
      _
    $region47: #{tpu_custom_call.1} parent=1 // pred_check_branch
      %43 = sbr.rel (0) target = $region49
    $region48: #{tpu_custom_call.1} parent=1 // pred_region
      _
    $region49: #{tpu_custom_call.1} parent=1 // pred_fallthru
      _
    // Predicated region
    $region50: #{tpu_custom_call.1} parent=1 // pred_check
      _
    $region51: #{tpu_custom_call.1} parent=1 // pred_check_branch
      %45 = sbr.rel (0) target = $region53
    $region52: #{tpu_custom_call.1} parent=1 // pred_region
      _
    $region53: #{tpu_custom_call.1} parent=1 // pred_fallthru
      _
    // Predicated region
    $region54: #{tpu_custom_call.1} parent=1 // pred_check
      _
    $region55: #{tpu_custom_call.1} parent=1 // pred_check_branch
      %47 = sbr.rel (0) target = $region57
    $region56: #{tpu_custom_call.1} parent=1 // pred_region
      _
    $region57: #{tpu_custom_call.1} parent=1 // pred_fallthru
      _
    %v48 = vld [vmem:[%s0] sm:$0xff]
    %v49 = vld [vmem:[%s0 + $0x8] sm:$0xff]
    %v50 = vld [vmem:[%s1] sm:$0xff]
    %v51 = vld [vmem:[%s1 + $0x8] sm:$0xff]
    %v52 = vld [vmem:[%s2] sm:$0xff]
    %v53 = vld [vmem:[%s2 + $0x8] sm:$0xff]
    %55 = vset.pattern.permute.xlu0 0
    %56 = vperm.xlu0 %55, %v52
    %v57 = vpop.permute.xlu0 %56
    %60 = vset.pattern.permute.xlu0 0
    %61 = vperm.xlu0 %60, %v53
    %v62 = vpop.permute.xlu0 %61
    %vm64 = vcmask 64512
    %v66 = vsel %vm64, %v50, 0
    %v69 = vsel %vm64, %v51, 0
    %71 = vmatprep.subr.mxu0 %v49
    %72 = vmatpush1.msra.mxu0 %v48
    %73 = vmatprep.subr.mxu0 0.0
    %74 = vmatpush1.msra.mxu0 0.0
    %75 = vmatprep.subr.mxu0 0.0
    %76 = vmatpush1.msra.mxu0 0.0
    %77 = vmatprep.subr.mxu0 0.0
    %78 = vmatpush1.msra.mxu0 0.0
    %79 = vmatprep.subr.mxu0 0.0
    %80 = vmatpush1.msra.mxu0 0.0
    %81 = vmatprep.subr.mxu0 0.0
    %82 = vmatpush1.msra.mxu0 0.0
    %83 = vmatprep.subr.mxu0 0.0
    %84 = vmatpush1.msra.mxu0 0.0
    %85 = vmatprep.subr.mxu0 0.0
    %86 = vmatpush1.msra.mxu0 0.0
    %87 = vmatprep.subr.mxu0 0.0
    %88 = vmatpush1.msra.mxu0 0.0
    %89 = vmatprep.subr.mxu0 0.0
    %90 = vmatpush1.msra.mxu0 0.0
    %91 = vmatprep.subr.mxu0 0.0
    %92 = vmatpush1.msra.mxu0 0.0
    %93 = vmatprep.subr.mxu0 0.0
    %94 = vmatpush1.msra.mxu0 0.0
    %95 = vmatprep.subr.mxu0 0.0
    %96 = vmatpush1.msra.mxu0 0.0
    %97 = vmatprep.subr.mxu0 0.0
    %98 = vmatpush1.msra.mxu0 0.0
    %99 = vmatprep.subr.mxu0 0.0
    %100 = vmatpush1.msra.mxu0 0.0
    %101 = vmatprep.subr.mxu0 0.0
    %102 = vmatpush1.msra.mxu0 0.0
    %103 = vmatprep.subr.mxu0 0.0
    %104 = vmatpush1.msra.mxu0 0.0
    %105 = vmatprep.subr.mxu0 0.0
    %106 = vmatpush1.msra.mxu0 0.0
    %107 = vmatprep.subr.mxu0 0.0
    %108 = vmatpush1.msra.mxu0 0.0
    %109 = vmatprep.subr.mxu0 0.0
    %110 = vmatpush1.msra.mxu0 0.0
    %111 = vmatprep.subr.mxu0 0.0
    %112 = vmatpush1.msra.mxu0 0.0
    %113 = vmatprep.subr.mxu0 0.0
    %114 = vmatpush1.msra.mxu0 0.0
    %115 = vmatprep.subr.mxu0 0.0
    %116 = vmatpush1.msra.mxu0 0.0
    %117 = vmatprep.subr.mxu0 0.0
    %118 = vmatpush1.msra.mxu0 0.0
    %119 = vmatprep.subr.mxu0 0.0
    %120 = vmatpush1.msra.mxu0 0.0
    %121 = vmatprep.subr.mxu0 0.0
    %122 = vmatpush1.msra.mxu0 0.0
    %123 = vmatprep.subr.mxu0 0.0
    %124 = vmatpush1.msra.mxu0 0.0
    %125 = vmatprep.subr.mxu0 0.0
    %126 = vmatpush1.msra.mxu0 0.0
    %127 = vmatprep.subr.mxu0 0.0
    %128 = vmatpush1.msra.mxu0 0.0
    %129 = vmatprep.subr.mxu0 0.0
    %130 = vmatpush1.msra.mxu0 0.0
    %131 = vmatprep.subr.mxu0 0.0
    %132 = vmatpush1.msra.mxu0 0.0
    %133 = vmatprep.subr.mxu0 0.0
    %134 = vmatpush1.msra.mxu0 0.0
    %135 = vmatprep.mubr.f32.mxu0 0.0
    %136 = vmatmul.mubr.f32.gmra.mrb[0].mxu0 %v66
    %v137 = vpop.f32.mrb[0].mxu0
    %v138 = vadd.f32 %v57, %v137
    %v139 = vpop.f32.mrb[0].mxu0
    %v140 = vadd.f32 %v57, %v139
    %141 = vmatprep.mubr.f32.mxu0 0.0
    %142 = vmatmul.mubr.f32.gmra.mrb[0].mxu0 %v69
    %v143 = vpop.f32.mrb[0].mxu0
    %v144 = vadd.f32 %v62, %v143
    %v145 = vpop.f32.mrb[0].mxu0
    %v146 = vadd.f32 %v62, %v145
    %147 = vdwg.mxu0
    %v148 = vld [vmem:[%s3] sm:$0xff]
    %v149 = vld [vmem:[%s3 + $0x8] sm:$0xff]
    %v150 = vld [vmem:[%s4] sm:$0xff]
    %v151 = vld [vmem:[%s4 + $0x8] sm:$0xff]
    %153 = vset.pattern.permute.xlu0 0
    %154 = vperm.xlu0 %153, %v150
    %v155 = vpop.permute.xlu0 %154
    %158 = vset.pattern.permute.xlu0 0
    %159 = vperm.xlu0 %158, %v151
    %v160 = vpop.permute.xlu0 %159
    %v163 = vsel %vm64, %v148, 0
    %v166 = vsel %vm64, %v149, 0
    %168 = vmatprep.subr.mxu0 %v49
    %169 = vmatpush1.msra.mxu0 %v48
    %170 = vmatprep.subr.mxu0 0.0
    %171 = vmatpush1.msra.mxu0 0.0
    %172 = vmatprep.subr.mxu0 0.0
    %173 = vmatpush1.msra.mxu0 0.0
    %174 = vmatprep.subr.mxu0 0.0
    %175 = vmatpush1.msra.mxu0 0.0
    %176 = vmatprep.subr.mxu0 0.0
    %177 = vmatpush1.msra.mxu0 0.0
    %178 = vmatprep.subr.mxu0 0.0
    %179 = vmatpush1.msra.mxu0 0.0
    %180 = vmatprep.subr.mxu0 0.0
    %181 = vmatpush1.msra.mxu0 0.0
    %182 = vmatprep.subr.mxu0 0.0
    %183 = vmatpush1.msra.mxu0 0.0
    %184 = vmatprep.subr.mxu0 0.0
    %185 = vmatpush1.msra.mxu0 0.0
    %186 = vmatprep.subr.mxu0 0.0
    %187 = vmatpush1.msra.mxu0 0.0
    %188 = vmatprep.subr.mxu0 0.0
    %189 = vmatpush1.msra.mxu0 0.0
    %190 = vmatprep.subr.mxu0 0.0
    %191 = vmatpush1.msra.mxu0 0.0
    %192 = vmatprep.subr.mxu0 0.0
    %193 = vmatpush1.msra.mxu0 0.0
    %194 = vmatprep.subr.mxu0 0.0
    %195 = vmatpush1.msra.mxu0 0.0
    %196 = vmatprep.subr.mxu0 0.0
    %197 = vmatpush1.msra.mxu0 0.0
    %198 = vmatprep.subr.mxu0 0.0
    %199 = vmatpush1.msra.mxu0 0.0
    %200 = vmatprep.subr.mxu0 0.0
    %201 = vmatpush1.msra.mxu0 0.0
    %202 = vmatprep.subr.mxu0 0.0
    %203 = vmatpush1.msra.mxu0 0.0
    %204 = vmatprep.subr.mxu0 0.0
    %205 = vmatpush1.msra.mxu0 0.0
    %206 = vmatprep.subr.mxu0 0.0
    %207 = vmatpush1.msra.mxu0 0.0
    %208 = vmatprep.subr.mxu0 0.0
    %209 = vmatpush1.msra.mxu0 0.0
    %210 = vmatprep.subr.mxu0 0.0
    %211 = vmatpush1.msra.mxu0 0.0
    %212 = vmatprep.subr.mxu0 0.0
    %213 = vmatpush1.msra.mxu0 0.0
    %214 = vmatprep.subr.mxu0 0.0
    %215 = vmatpush1.msra.mxu0 0.0
    %216 = vmatprep.subr.mxu0 0.0
    %217 = vmatpush1.msra.mxu0 0.0
    %218 = vmatprep.subr.mxu0 0.0
    %219 = vmatpush1.msra.mxu0 0.0
    %220 = vmatprep.subr.mxu0 0.0
    %221 = vmatpush1.msra.mxu0 0.0
    %222 = vmatprep.subr.mxu0 0.0
    %223 = vmatpush1.msra.mxu0 0.0
    %224 = vmatprep.subr.mxu0 0.0
    %225 = vmatpush1.msra.mxu0 0.0
    %226 = vmatprep.subr.mxu0 0.0
    %227 = vmatpush1.msra.mxu0 0.0
    %228 = vmatprep.subr.mxu0 0.0
    %229 = vmatpush1.msra.mxu0 0.0
    %230 = vmatprep.subr.mxu0 0.0
    %231 = vmatpush1.msra.mxu0 0.0
    %232 = vmatprep.mubr.f32.mxu0 0.0
    %233 = vmatmul.mubr.f32.gmra.mrb[0].mxu0 %v163
    %v234 = vpop.f32.mrb[0].mxu0
    %v235 = vadd.f32 %v155, %v234
    %v236 = vpop.f32.mrb[0].mxu0
    %v237 = vadd.f32 %v155, %v236
    %238 = vmatprep.mubr.f32.mxu0 0.0
    %239 = vmatmul.mubr.f32.gmra.mrb[0].mxu0 %v166
    %v240 = vpop.f32.mrb[0].mxu0
    %v241 = vadd.f32 %v160, %v240
    %v242 = vpop.f32.mrb[0].mxu0
    %v243 = vadd.f32 %v160, %v242
    %244 = vdwg.mxu0
    %v245 = vld [vmem:[%s5] sm:$0xff]
    %v246 = vld [vmem:[%s6] sm:$0xff]
    %vm247 = vcmask 130048
    %v249 = vsel %vm247, %v246, 0
    %251 = vmatprep.subr.mxu0 %v237
    %252 = vmatpush1.msra.mxu0 %v235
    %253 = vmatprep.subr.mxu0 %v243
    %254 = vmatpush1.msra.mxu0 %v241
    %255 = vmatprep.subr.mxu0 0.0
    %256 = vmatpush1.msra.mxu0 0.0
    %257 = vmatprep.subr.mxu0 0.0
    %258 = vmatpush1.msra.mxu0 0.0
    %259 = vmatprep.subr.mxu0 0.0
    %260 = vmatpush1.msra.mxu0 0.0
    %261 = vmatprep.subr.mxu0 0.0
    %262 = vmatpush1.msra.mxu0 0.0
    %263 = vmatprep.subr.mxu0 0.0
    %264 = vmatpush1.msra.mxu0 0.0
    %265 = vmatprep.subr.mxu0 0.0
    %266 = vmatpush1.msra.mxu0 0.0
    %267 = vmatprep.subr.mxu0 0.0
    %268 = vmatpush1.msra.mxu0 0.0
    %269 = vmatprep.subr.mxu0 0.0
    %270 = vmatpush1.msra.mxu0 0.0
    %271 = vmatprep.subr.mxu0 0.0
    %272 = vmatpush1.msra.mxu0 0.0
    %273 = vmatprep.subr.mxu0 0.0
    %274 = vmatpush1.msra.mxu0 0.0
    %275 = vmatprep.subr.mxu0 0.0
    %276 = vmatpush1.msra.mxu0 0.0
    %277 = vmatprep.subr.mxu0 0.0
    %278 = vmatpush1.msra.mxu0 0.0
    %279 = vmatprep.subr.mxu0 0.0
    %280 = vmatpush1.msra.mxu0 0.0
    %281 = vmatprep.subr.mxu0 0.0
    %282 = vmatpush1.msra.mxu0 0.0
    %283 = vmatprep.subr.mxu0 0.0
    %284 = vmatpush1.msra.mxu0 0.0
    %285 = vmatprep.subr.mxu0 0.0
    %286 = vmatpush1.msra.mxu0 0.0
    %287 = vmatprep.subr.mxu0 0.0
    %288 = vmatpush1.msra.mxu0 0.0
    %289 = vmatprep.subr.mxu0 0.0
    %290 = vmatpush1.msra.mxu0 0.0
    %291 = vmatprep.subr.mxu0 0.0
    %292 = vmatpush1.msra.mxu0 0.0
    %293 = vmatprep.subr.mxu0 0.0
    %294 = vmatpush1.msra.mxu0 0.0
    %295 = vmatprep.subr.mxu0 0.0
    %296 = vmatpush1.msra.mxu0 0.0
    %297 = vmatprep.subr.mxu0 0.0
    %298 = vmatpush1.msra.mxu0 0.0
    %299 = vmatprep.subr.mxu0 0.0
    %300 = vmatpush1.msra.mxu0 0.0
    %301 = vmatprep.subr.mxu0 0.0
    %302 = vmatpush1.msra.mxu0 0.0
    %303 = vmatprep.subr.mxu0 0.0
    %304 = vmatpush1.msra.mxu0 0.0
    %305 = vmatprep.subr.mxu0 0.0
    %306 = vmatpush1.msra.mxu0 0.0
    %307 = vmatprep.subr.mxu0 0.0
    %308 = vmatpush1.msra.mxu0 0.0
    %309 = vmatprep.subr.mxu0 0.0
    %310 = vmatpush1.msra.mxu0 0.0
    %311 = vmatprep.subr.mxu0 0.0
    %312 = vmatpush1.msra.mxu0 0.0
    %313 = vmatprep.subr.mxu0 0.0
    %314 = vmatpush1.msra.mxu0 0.0
    %315 = vmatprep.mubr.f32.mxu0 0.0
    %316 = vmatmul.mubr.f32.gmra.mrb[0].mxu0 %v249
    %v317 = vpop.f32.mrb[0].mxu0
    %v318 = vadd.f32 0.0, %v317
    %v319 = vpop.f32.mrb[0].mxu0
    %v320 = vadd.f32 0.0, %v319
    %321 = vdwg.mxu0
    %v323 = vsel %vm247, %v245, 0
    %325 = vmatprep.subr.mxu0 %v140
    %326 = vmatpush1.msra.mxu0 %v138
    %327 = vmatprep.subr.mxu0 %v146
    %328 = vmatpush1.msra.mxu0 %v144
    %329 = vmatprep.subr.mxu0 0.0
    %330 = vmatpush1.msra.mxu0 0.0
    %331 = vmatprep.subr.mxu0 0.0
    %332 = vmatpush1.msra.mxu0 0.0
    %333 = vmatprep.subr.mxu0 0.0
    %334 = vmatpush1.msra.mxu0 0.0
    %335 = vmatprep.subr.mxu0 0.0
    %336 = vmatpush1.msra.mxu0 0.0
    %337 = vmatprep.subr.mxu0 0.0
    %338 = vmatpush1.msra.mxu0 0.0
    %339 = vmatprep.subr.mxu0 0.0
    %340 = vmatpush1.msra.mxu0 0.0
    %341 = vmatprep.subr.mxu0 0.0
    %342 = vmatpush1.msra.mxu0 0.0
    %343 = vmatprep.subr.mxu0 0.0
    %344 = vmatpush1.msra.mxu0 0.0
    %345 = vmatprep.subr.mxu0 0.0
    %346 = vmatpush1.msra.mxu0 0.0
    %347 = vmatprep.subr.mxu0 0.0
    %348 = vmatpush1.msra.mxu0 0.0
    %349 = vmatprep.subr.mxu0 0.0
    %350 = vmatpush1.msra.mxu0 0.0
    %351 = vmatprep.subr.mxu0 0.0
    %352 = vmatpush1.msra.mxu0 0.0
    %353 = vmatprep.subr.mxu0 0.0
    %354 = vmatpush1.msra.mxu0 0.0
    %355 = vmatprep.subr.mxu0 0.0
    %356 = vmatpush1.msra.mxu0 0.0
    %357 = vmatprep.subr.mxu0 0.0
    %358 = vmatpush1.msra.mxu0 0.0
    %359 = vmatprep.subr.mxu0 0.0
    %360 = vmatpush1.msra.mxu0 0.0
    %361 = vmatprep.subr.mxu0 0.0
    %362 = vmatpush1.msra.mxu0 0.0
    %363 = vmatprep.subr.mxu0 0.0
    %364 = vmatpush1.msra.mxu0 0.0
    %365 = vmatprep.subr.mxu0 0.0
    %366 = vmatpush1.msra.mxu0 0.0
    %367 = vmatprep.subr.mxu0 0.0
    %368 = vmatpush1.msra.mxu0 0.0
    %369 = vmatprep.subr.mxu0 0.0
    %370 = vmatpush1.msra.mxu0 0.0
    %371 = vmatprep.subr.mxu0 0.0
    %372 = vmatpush1.msra.mxu0 0.0
    %373 = vmatprep.subr.mxu0 0.0
    %374 = vmatpush1.msra.mxu0 0.0
    %375 = vmatprep.subr.mxu0 0.0
    %376 = vmatpush1.msra.mxu0 0.0
    %377 = vmatprep.subr.mxu0 0.0
    %378 = vmatpush1.msra.mxu0 0.0
    %379 = vmatprep.subr.mxu0 0.0
    %380 = vmatpush1.msra.mxu0 0.0
    %381 = vmatprep.subr.mxu0 0.0
    %382 = vmatpush1.msra.mxu0 0.0
    %383 = vmatprep.subr.mxu0 0.0
    %384 = vmatpush1.msra.mxu0 0.0
    %385 = vmatprep.subr.mxu0 0.0
    %386 = vmatpush1.msra.mxu0 0.0
    %387 = vmatprep.subr.mxu0 0.0
    %388 = vmatpush1.msra.mxu0 0.0
    %389 = vmatprep.mubr.f32.mxu0 0.0
    %390 = vmatmul.mubr.f32.gmra.mrb[0].mxu0 %v323
    %v391 = vpop.f32.mrb[0].mxu0
    %v392 = vadd.f32 %v318, %v391
    %v393 = vpop.f32.mrb[0].mxu0
    %v394 = vadd.f32 %v320, %v393
    %395 = vdwg.mxu0
    %v396 = vld [vmem:[%s7] sm:$0xff]
    %398 = vset.pattern.permute.xlu0 0
    %399 = vperm.xlu0 %398, %v396
    %v400 = vpop.permute.xlu0 %399
    %v402 = vadd.f32 %v392, %v400
    %v403 = vadd.f32 %v394, %v400
    %404 = vst [vmem:[#allocation2] sm:$0xff] %v402
    %405 = vst [vmem:[#allocation2 + $0x8] sm:$0xff] %v403
    %s406 = scalar_lea.vmem %s0, 16
    %v407 = vld [vmem:[%s406] sm:$0xff]
    %v408 = vld [vmem:[%s406 + $0x8] sm:$0xff]
    %v409 = vld [vmem:[%s1] sm:$0xff]
    %v410 = vld [vmem:[%s1 + $0x8] sm:$0xff]
    %v411 = vld [vmem:[%s2] sm:$0xff]
    %v412 = vld [vmem:[%s2 + $0x8] sm:$0xff]
    %414 = vset.pattern.permute.xlu0 0
    %415 = vperm.xlu0 %414, %v411
    %v416 = vpop.permute.xlu0 %415
    %419 = vset.pattern.permute.xlu0 0
    %420 = vperm.xlu0 %419, %v412
    %v421 = vpop.permute.xlu0 %420
    %v424 = vsel %vm64, %v409, 0
    %v427 = vsel %vm64, %v410, 0
    %429 = vmatprep.subr.mxu0 %v408
    %430 = vmatpush1.msra.mxu0 %v407
    %431 = vmatprep.subr.mxu0 0.0
    %432 = vmatpush1.msra.mxu0 0.0
    %433 = vmatprep.subr.mxu0 0.0
    %434 = vmatpush1.msra.mxu0 0.0
    %435 = vmatprep.subr.mxu0 0.0
    %436 = vmatpush1.msra.mxu0 0.0
    %437 = vmatprep.subr.mxu0 0.0
    %438 = vmatpush1.msra.mxu0 0.0
    %439 = vmatprep.subr.mxu0 0.0
    %440 = vmatpush1.msra.mxu0 0.0
    %441 = vmatprep.subr.mxu0 0.0
    %442 = vmatpush1.msra.mxu0 0.0
    %443 = vmatprep.subr.mxu0 0.0
    %444 = vmatpush1.msra.mxu0 0.0
    %445 = vmatprep.subr.mxu0 0.0
    %446 = vmatpush1.msra.mxu0 0.0
    %447 = vmatprep.subr.mxu0 0.0
    %448 = vmatpush1.msra.mxu0 0.0
    %449 = vmatprep.subr.mxu0 0.0
    %450 = vmatpush1.msra.mxu0 0.0
    %451 = vmatprep.subr.mxu0 0.0
    %452 = vmatpush1.msra.mxu0 0.0
    %453 = vmatprep.subr.mxu0 0.0
    %454 = vmatpush1.msra.mxu0 0.0
    %455 = vmatprep.subr.mxu0 0.0
    %456 = vmatpush1.msra.mxu0 0.0
    %457 = vmatprep.subr.mxu0 0.0
    %458 = vmatpush1.msra.mxu0 0.0
    %459 = vmatprep.subr.mxu0 0.0
    %460 = vmatpush1.msra.mxu0 0.0
    %461 = vmatprep.subr.mxu0 0.0
    %462 = vmatpush1.msra.mxu0 0.0
    %463 = vmatprep.subr.mxu0 0.0
    %464 = vmatpush1.msra.mxu0 0.0
    %465 = vmatprep.subr.mxu0 0.0
    %466 = vmatpush1.msra.mxu0 0.0
    %467 = vmatprep.subr.mxu0 0.0
    %468 = vmatpush1.msra.mxu0 0.0
    %469 = vmatprep.subr.mxu0 0.0
    %470 = vmatpush1.msra.mxu0 0.0
    %471 = vmatprep.subr.mxu0 0.0
    %472 = vmatpush1.msra.mxu0 0.0
    %473 = vmatprep.subr.mxu0 0.0
    %474 = vmatpush1.msra.mxu0 0.0
    %475 = vmatprep.subr.mxu0 0.0
    %476 = vmatpush1.msra.mxu0 0.0
    %477 = vmatprep.subr.mxu0 0.0
    %478 = vmatpush1.msra.mxu0 0.0
    %479 = vmatprep.subr.mxu0 0.0
    %480 = vmatpush1.msra.mxu0 0.0
    %481 = vmatprep.subr.mxu0 0.0
    %482 = vmatpush1.msra.mxu0 0.0
    %483 = vmatprep.subr.mxu0 0.0
    %484 = vmatpush1.msra.mxu0 0.0
    %485 = vmatprep.subr.mxu0 0.0
    %486 = vmatpush1.msra.mxu0 0.0
    %487 = vmatprep.subr.mxu0 0.0
    %488 = vmatpush1.msra.mxu0 0.0
    %489 = vmatprep.subr.mxu0 0.0
    %490 = vmatpush1.msra.mxu0 0.0
    %491 = vmatprep.subr.mxu0 0.0
    %492 = vmatpush1.msra.mxu0 0.0
    %493 = vmatprep.mubr.f32.mxu0 0.0
    %494 = vmatmul.mubr.f32.gmra.mrb[0].mxu0 %v424
    %v495 = vpop.f32.mrb[0].mxu0
    %v496 = vadd.f32 %v416, %v495
    %v497 = vpop.f32.mrb[0].mxu0
    %v498 = vadd.f32 %v416, %v497
    %499 = vmatprep.mubr.f32.mxu0 0.0
    %500 = vmatmul.mubr.f32.gmra.mrb[0].mxu0 %v427
    %v501 = vpop.f32.mrb[0].mxu0
    %v502 = vadd.f32 %v421, %v501
    %v503 = vpop.f32.mrb[0].mxu0
    %v504 = vadd.f32 %v421, %v503
    %505 = vdwg.mxu0
    %v506 = vld [vmem:[%s3] sm:$0xff]
    %v507 = vld [vmem:[%s3 + $0x8] sm:$0xff]
    %v508 = vld [vmem:[%s4] sm:$0xff]
    %v509 = vld [vmem:[%s4 + $0x8] sm:$0xff]
    %511 = vset.pattern.permute.xlu0 0
    %512 = vperm.xlu0 %511, %v508
    %v513 = vpop.permute.xlu0 %512
    %516 = vset.pattern.permute.xlu0 0
    %517 = vperm.xlu0 %516, %v509
    %v518 = vpop.permute.xlu0 %517
    %v521 = vsel %vm64, %v506, 0
    %v524 = vsel %vm64, %v507, 0
    %526 = vmatprep.subr.mxu0 %v408
    %527 = vmatpush1.msra.mxu0 %v407
    %528 = vmatprep.subr.mxu0 0.0
    %529 = vmatpush1.msra.mxu0 0.0
    %530 = vmatprep.subr.mxu0 0.0
    %531 = vmatpush1.msra.mxu0 0.0
    %532 = vmatprep.subr.mxu0 0.0
    %533 = vmatpush1.msra.mxu0 0.0
    %534 = vmatprep.subr.mxu0 0.0
    %535 = vmatpush1.msra.mxu0 0.0
    %536 = vmatprep.subr.mxu0 0.0
    %537 = vmatpush1.msra.mxu0 0.0
    %538 = vmatprep.subr.mxu0 0.0
    %539 = vmatpush1.msra.mxu0 0.0
    %540 = vmatprep.subr.mxu0 0.0
    %541 = vmatpush1.msra.mxu0 0.0
    %542 = vmatprep.subr.mxu0 0.0
    %543 = vmatpush1.msra.mxu0 0.0
    %544 = vmatprep.subr.mxu0 0.0
    %545 = vmatpush1.msra.mxu0 0.0
    %546 = vmatprep.subr.mxu0 0.0
    %547 = vmatpush1.msra.mxu0 0.0
    %548 = vmatprep.subr.mxu0 0.0
    %549 = vmatpush1.msra.mxu0 0.0
    %550 = vmatprep.subr.mxu0 0.0
    %551 = vmatpush1.msra.mxu0 0.0
    %552 = vmatprep.subr.mxu0 0.0
    %553 = vmatpush1.msra.mxu0 0.0
    %554 = vmatprep.subr.mxu0 0.0
    %555 = vmatpush1.msra.mxu0 0.0
    %556 = vmatprep.subr.mxu0 0.0
    %557 = vmatpush1.msra.mxu0 0.0
    %558 = vmatprep.subr.mxu0 0.0
    %559 = vmatpush1.msra.mxu0 0.0
    %560 = vmatprep.subr.mxu0 0.0
    %561 = vmatpush1.msra.mxu0 0.0
    %562 = vmatprep.subr.mxu0 0.0
    %563 = vmatpush1.msra.mxu0 0.0
    %564 = vmatprep.subr.mxu0 0.0
    %565 = vmatpush1.msra.mxu0 0.0
    %566 = vmatprep.subr.mxu0 0.0
    %567 = vmatpush1.msra.mxu0 0.0
    %568 = vmatprep.subr.mxu0 0.0
    %569 = vmatpush1.msra.mxu0 0.0
    %570 = vmatprep.subr.mxu0 0.0
    %571 = vmatpush1.msra.mxu0 0.0
    %572 = vmatprep.subr.mxu0 0.0
    %573 = vmatpush1.msra.mxu0 0.0
    %574 = vmatprep.subr.mxu0 0.0
    %575 = vmatpush1.msra.mxu0 0.0
    %576 = vmatprep.subr.mxu0 0.0
    %577 = vmatpush1.msra.mxu0 0.0
    %578 = vmatprep.subr.mxu0 0.0
    %579 = vmatpush1.msra.mxu0 0.0
    %580 = vmatprep.subr.mxu0 0.0
    %581 = vmatpush1.msra.mxu0 0.0
    %582 = vmatprep.subr.mxu0 0.0
    %583 = vmatpush1.msra.mxu0 0.0
    %584 = vmatprep.subr.mxu0 0.0
    %585 = vmatpush1.msra.mxu0 0.0
    %586 = vmatprep.subr.mxu0 0.0
    %587 = vmatpush1.msra.mxu0 0.0
    %588 = vmatprep.subr.mxu0 0.0
    %589 = vmatpush1.msra.mxu0 0.0
    %590 = vmatprep.mubr.f32.mxu0 0.0
    %591 = vmatmul.mubr.f32.gmra.mrb[0].mxu0 %v521
    %v592 = vpop.f32.mrb[0].mxu0
    %v593 = vadd.f32 %v513, %v592
    %v594 = vpop.f32.mrb[0].mxu0
    %v595 = vadd.f32 %v513, %v594
    %596 = vmatprep.mubr.f32.mxu0 0.0
    %597 = vmatmul.mubr.f32.gmra.mrb[0].mxu0 %v524
    %v598 = vpop.f32.mrb[0].mxu0
    %v599 = vadd.f32 %v518, %v598
    %v600 = vpop.f32.mrb[0].mxu0
    %v601 = vadd.f32 %v518, %v600
    %602 = vdwg.mxu0
    %v603 = vld [vmem:[%s5] sm:$0xff]
    %v604 = vld [vmem:[%s6] sm:$0xff]
    %v606 = vsel %vm247, %v604, 0
    %608 = vmatprep.subr.mxu0 %v595
    %609 = vmatpush1.msra.mxu0 %v593
    %610 = vmatprep.subr.mxu0 %v601
    %611 = vmatpush1.msra.mxu0 %v599
    %612 = vmatprep.subr.mxu0 0.0
    %613 = vmatpush1.msra.mxu0 0.0
    %614 = vmatprep.subr.mxu0 0.0
    %615 = vmatpush1.msra.mxu0 0.0
    %616 = vmatprep.subr.mxu0 0.0
    %617 = vmatpush1.msra.mxu0 0.0
    %618 = vmatprep.subr.mxu0 0.0
    %619 = vmatpush1.msra.mxu0 0.0
    %620 = vmatprep.subr.mxu0 0.0
    %621 = vmatpush1.msra.mxu0 0.0
    %622 = vmatprep.subr.mxu0 0.0
    %623 = vmatpush1.msra.mxu0 0.0
    %624 = vmatprep.subr.mxu0 0.0
    %625 = vmatpush1.msra.mxu0 0.0
    %626 = vmatprep.subr.mxu0 0.0
    %627 = vmatpush1.msra.mxu0 0.0
    %628 = vmatprep.subr.mxu0 0.0
    %629 = vmatpush1.msra.mxu0 0.0
    %630 = vmatprep.subr.mxu0 0.0
    %631 = vmatpush1.msra.mxu0 0.0
    %632 = vmatprep.subr.mxu0 0.0
    %633 = vmatpush1.msra.mxu0 0.0
    %634 = vmatprep.subr.mxu0 0.0
    %635 = vmatpush1.msra.mxu0 0.0
    %636 = vmatprep.subr.mxu0 0.0
    %637 = vmatpush1.msra.mxu0 0.0
    %638 = vmatprep.subr.mxu0 0.0
    %639 = vmatpush1.msra.mxu0 0.0
    %640 = vmatprep.subr.mxu0 0.0
    %641 = vmatpush1.msra.mxu0 0.0
    %642 = vmatprep.subr.mxu0 0.0
    %643 = vmatpush1.msra.mxu0 0.0
    %644 = vmatprep.subr.mxu0 0.0
    %645 = vmatpush1.msra.mxu0 0.0
    %646 = vmatprep.subr.mxu0 0.0
    %647 = vmatpush1.msra.mxu0 0.0
    %648 = vmatprep.subr.mxu0 0.0
    %649 = vmatpush1.msra.mxu0 0.0
    %650 = vmatprep.subr.mxu0 0.0
    %651 = vmatpush1.msra.mxu0 0.0
    %652 = vmatprep.subr.mxu0 0.0
    %653 = vmatpush1.msra.mxu0 0.0
    %654 = vmatprep.subr.mxu0 0.0
    %655 = vmatpush1.msra.mxu0 0.0
    %656 = vmatprep.subr.mxu0 0.0
    %657 = vmatpush1.msra.mxu0 0.0
    %658 = vmatprep.subr.mxu0 0.0
    %659 = vmatpush1.msra.mxu0 0.0
    %660 = vmatprep.subr.mxu0 0.0
    %661 = vmatpush1.msra.mxu0 0.0
    %662 = vmatprep.subr.mxu0 0.0
    %663 = vmatpush1.msra.mxu0 0.0
    %664 = vmatprep.subr.mxu0 0.0
    %665 = vmatpush1.msra.mxu0 0.0
    %666 = vmatprep.subr.mxu0 0.0
    %667 = vmatpush1.msra.mxu0 0.0
    %668 = vmatprep.subr.mxu0 0.0
    %669 = vmatpush1.msra.mxu0 0.0
    %670 = vmatprep.subr.mxu0 0.0
    %671 = vmatpush1.msra.mxu0 0.0
    %672 = vmatprep.mubr.f32.mxu0 0.0
    %673 = vmatmul.mubr.f32.gmra.mrb[0].mxu0 %v606
    %v674 = vpop.f32.mrb[0].mxu0
    %v675 = vadd.f32 0.0, %v674
    %v676 = vpop.f32.mrb[0].mxu0
    %v677 = vadd.f32 0.0, %v676
    %678 = vdwg.mxu0
    %v680 = vsel %vm247, %v603, 0
    %682 = vmatprep.subr.mxu0 %v498
    %683 = vmatpush1.msra.mxu0 %v496
    %684 = vmatprep.subr.mxu0 %v504
    %685 = vmatpush1.msra.mxu0 %v502
    %686 = vmatprep.subr.mxu0 0.0
    %687 = vmatpush1.msra.mxu0 0.0
    %688 = vmatprep.subr.mxu0 0.0
    %689 = vmatpush1.msra.mxu0 0.0
    %690 = vmatprep.subr.mxu0 0.0
    %691 = vmatpush1.msra.mxu0 0.0
    %692 = vmatprep.subr.mxu0 0.0
    %693 = vmatpush1.msra.mxu0 0.0
    %694 = vmatprep.subr.mxu0 0.0
    %695 = vmatpush1.msra.mxu0 0.0
    %696 = vmatprep.subr.mxu0 0.0
    %697 = vmatpush1.msra.mxu0 0.0
    %698 = vmatprep.subr.mxu0 0.0
    %699 = vmatpush1.msra.mxu0 0.0
    %700 = vmatprep.subr.mxu0 0.0
    %701 = vmatpush1.msra.mxu0 0.0
    %702 = vmatprep.subr.mxu0 0.0
    %703 = vmatpush1.msra.mxu0 0.0
    %704 = vmatprep.subr.mxu0 0.0
    %705 = vmatpush1.msra.mxu0 0.0
    %706 = vmatprep.subr.mxu0 0.0
    %707 = vmatpush1.msra.mxu0 0.0
    %708 = vmatprep.subr.mxu0 0.0
    %709 = vmatpush1.msra.mxu0 0.0
    %710 = vmatprep.subr.mxu0 0.0
    %711 = vmatpush1.msra.mxu0 0.0
    %712 = vmatprep.subr.mxu0 0.0
    %713 = vmatpush1.msra.mxu0 0.0
    %714 = vmatprep.subr.mxu0 0.0
    %715 = vmatpush1.msra.mxu0 0.0
    %716 = vmatprep.subr.mxu0 0.0
    %717 = vmatpush1.msra.mxu0 0.0
    %718 = vmatprep.subr.mxu0 0.0
    %719 = vmatpush1.msra.mxu0 0.0
    %720 = vmatprep.subr.mxu0 0.0
    %721 = vmatpush1.msra.mxu0 0.0
    %722 = vmatprep.subr.mxu0 0.0
    %723 = vmatpush1.msra.mxu0 0.0
    %724 = vmatprep.subr.mxu0 0.0
    %725 = vmatpush1.msra.mxu0 0.0
    %726 = vmatprep.subr.mxu0 0.0
    %727 = vmatpush1.msra.mxu0 0.0
    %728 = vmatprep.subr.mxu0 0.0
    %729 = vmatpush1.msra.mxu0 0.0
    %730 = vmatprep.subr.mxu0 0.0
    %731 = vmatpush1.msra.mxu0 0.0
    %732 = vmatprep.subr.mxu0 0.0
    %733 = vmatpush1.msra.mxu0 0.0
    %734 = vmatprep.subr.mxu0 0.0
    %735 = vmatpush1.msra.mxu0 0.0
    %736 = vmatprep.subr.mxu0 0.0
    %737 = vmatpush1.msra.mxu0 0.0
    %738 = vmatprep.subr.mxu0 0.0
    %739 = vmatpush1.msra.mxu0 0.0
    %740 = vmatprep.subr.mxu0 0.0
    %741 = vmatpush1.msra.mxu0 0.0
    %742 = vmatprep.subr.mxu0 0.0
    %743 = vmatpush1.msra.mxu0 0.0
    %744 = vmatprep.subr.mxu0 0.0
    %745 = vmatpush1.msra.mxu0 0.0
    %746 = vmatprep.mubr.f32.mxu0 0.0
    %747 = vmatmul.mubr.f32.gmra.mrb[0].mxu0 %v680
    %v748 = vpop.f32.mrb[0].mxu0
    %v749 = vadd.f32 %v675, %v748
    %v750 = vpop.f32.mrb[0].mxu0
    %v751 = vadd.f32 %v677, %v750
    %752 = vdwg.mxu0
    %v753 = vld [vmem:[%s7] sm:$0xff]
    %755 = vset.pattern.permute.xlu0 0
    %756 = vperm.xlu0 %755, %v753
    %v757 = vpop.permute.xlu0 %756
    %v759 = vadd.f32 %v749, %v757
    %v760 = vadd.f32 %v751, %v757
    %s761 = scalar_lea.vmem [#allocation2], 16
    %762 = vst [vmem:[%s761] sm:$0xff] %v759
    %763 = vst [vmem:[%s761 + $0x8] sm:$0xff] %v760
    %v764 = vld [vmem:[#allocation2] sm:$0xff]
    %v765 = vld [vmem:[#allocation2 + $0x8] sm:$0xff]
    %v766 = vld [vmem:[#allocation2 + $0x10] sm:$0xff]
    %v767 = vld [vmem:[#allocation2 + $0x18] sm:$0xff]
    %v768 = vld [vmem:[%s8] sm:$0xff]
    %v769 = vld [vmem:[%s9] sm:$0xff]
    %v770 = vadd.f32 %v764, %v765
    %771 = vadd.xlane.f32.xlu0 %v770
    %v772 = vpop.xlane.xlu0 %771
    %v773 = vadd.f32 %v766, %v767
    %774 = vadd.xlane.f32.xlu0 %v773
    %v775 = vpop.xlane.xlu0 %774
    %v776 = vadd.f32 %v772, %v775
    %v777 = vmul.f32 %v764, %v764
    %v778 = vmul.f32 %v765, %v765
    %v779 = vmul.f32 %v766, %v766
    %v780 = vmul.f32 %v767, %v767
    %v781 = vadd.f32 %v777, %v778
    %782 = vadd.xlane.f32.xlu0 %v781
    %v783 = vpop.xlane.xlu0 %782
    %v784 = vadd.f32 %v779, %v780
    %785 = vadd.xlane.f32.xlu0 %v784
    %v786 = vpop.xlane.xlu0 %785
    %v787 = vadd.f32 %v783, %v786
    %v788 = vmul.f32 %v776, 0.001953125
    %v789 = vmul.f32 %v787, 0.001953125
    %v790 = vmul.f32 %v788, %v788
    %v791 = vsub.f32 %v789, %v790
    %v792 = vadd.f32 %v791, 1e-05
    %v793 = vrsqrt.pop %v792
    %v794 = vsub.f32 %v764, %v788
    %v795 = vsub.f32 %v765, %v788
    %v796 = vsub.f32 %v766, %v788
    %v797 = vsub.f32 %v767, %v788
    %v798 = vmul.f32 %v793, %v768
    %800 = vset.pattern.permute.xlu0 0
    %801 = vperm.xlu0 %800, %v798
    %v802 = vpop.permute.xlu0 %801
    %v804 = vmul.f32 %v794, %v802
    %v805 = vmul.f32 %v795, %v802
    %v806 = vmul.f32 %v796, %v802
    %v807 = vmul.f32 %v797, %v802
    %809 = vset.pattern.permute.xlu0 0
    %810 = vperm.xlu0 %809, %v769
    %v811 = vpop.permute.xlu0 %810
    %v813 = vadd.f32 %v804, %v811
    %v814 = vadd.f32 %v805, %v811
    %v815 = vadd.f32 %v806, %v811
    %v816 = vadd.f32 %v807, %v811
    %v817 = vmul.f32 %v813, 0.5
    %v818 = vmul.f32 %v814, 0.5
    %v819 = vmul.f32 %v815, 0.5
    %v820 = vmul.f32 %v816, 0.5
    %v821 = vmul.f32 %v813, 0.70710677
    %v822 = vmul.f32 %v814, 0.70710677
    %v823 = vmul.f32 %v815, 0.70710677
    %v824 = vmul.f32 %v816, 0.70710677
    %v825 = verf.f32.pop %v821
    %v826 = verf.f32.pop %v822
    %v827 = verf.f32.pop %v823
    %v828 = verf.f32.pop %v824
    %v829 = vadd.f32 %v825, 1.0
    %v830 = vadd.f32 %v826, 1.0
    %v831 = vadd.f32 %v827, 1.0
    %v832 = vadd.f32 %v828, 1.0
    %v833 = vmul.f32 %v817, %v829
    %v834 = vmul.f32 %v818, %v830
    %v835 = vmul.f32 %v819, %v831
    %v836 = vmul.f32 %v820, %v832
    %v837 = vlaneseq
    %v838 = vand.u32 %v837, 127
    %v839 = vadd.s32 %v838, 128
    %v840 = vand.u32 %v838, 15
    %v841 = vand.u32 %v839, 15
    %844 = vrot.lane.b32.xlu0 %v834, 17
    %v845 = vpop.permute.xlu0 %844
    %846 = vrot.lane.b32.xlu0 %v836, 17
    %v847 = vpop.permute.xlu0 %846
    %852 = vrot.lane.b32.xlu0 %v833, 17
    %v853 = vpop.permute.xlu0 %852
    %854 = vrot.lane.b32.xlu0 %v835, 17
    %v855 = vpop.permute.xlu0 %854
    %vm856 = vcmask 138240
    %v857 = vsel %vm856, %v853, %v845
    %v858 = vsel %vm856, %v855, %v847
    %v863 = vsel %vm856, %v845, %v853
    %v864 = vsel %vm856, %v847, %v855
    %vm865 = vcmp.ge.s32.totalorder %v838, 16
    %vm866 = vcmp.ge.s32.totalorder %v839, 16
    %vm867 = vcmp.ge.s32.totalorder %v840, 1
    %vm868 = vcmp.ge.s32.totalorder %v841, 1
    %vm869 = vmand %vm865, %vm867
    %vm870 = vmand %vm866, %vm868
    %v871 = vsel %vm869, %v863, 0.0
    %v872 = vsel %vm870, %v857, 0.0
    %v873 = vsel %vm869, %v864, 0.0
    %v874 = vsel %vm870, %v858, 0.0
    %v875 = vld [vmem:[%s10] sm:$0xff]
    %877 = vset.pattern.permute.xlu0 0
    %878 = vperm.xlu0 %877, %v875
    %v879 = vpop.permute.xlu0 %878
    %v881 = vmul.f32 %v879, %v871
    %v882 = vmul.f32 %v879, %v872
    %v883 = vmul.f32 %v879, %v873
    %v884 = vmul.f32 %v879, %v874
    %v885 = vadd.f32 %v881, 0.0
    %v886 = vadd.f32 %v882, 0.0
    %v887 = vadd.f32 %v883, 0.0
    %v888 = vadd.f32 %v884, 0.0
    %889 = vrot.lane.b32.xlu0 %v834, 16
    %v890 = vpop.permute.xlu0 %889
    %891 = vrot.lane.b32.xlu0 %v836, 16
    %v892 = vpop.permute.xlu0 %891
    %895 = vrot.lane.b32.xlu0 %v833, 16
    %v896 = vpop.permute.xlu0 %895
    %897 = vrot.lane.b32.xlu0 %v835, 16
    %v898 = vpop.permute.xlu0 %897
    %v899 = vsel %vm247, %v896, %v890
    %v900 = vsel %vm247, %v898, %v892
    %v905 = vsel %vm247, %v890, %v896
    %v906 = vsel %vm247, %v892, %v898
    %v907 = vsel %vm865, %v905, 0.0
    %v908 = vsel %vm866, %v899, 0.0
    %v909 = vsel %vm865, %v906, 0.0
    %v910 = vsel %vm866, %v900, 0.0
    %s911 = scalar_lea.vmem %s10, 8
    %v912 = vld [vmem:[%s911] sm:$0xff]
    %914 = vset.pattern.permute.xlu0 0
    %915 = vperm.xlu0 %914, %v912
    %v916 = vpop.permute.xlu0 %915
    %v918 = vmul.f32 %v916, %v907
    %v919 = vmul.f32 %v916, %v908
    %v920 = vmul.f32 %v916, %v909
    %v921 = vmul.f32 %v916, %v910
    %v922 = vadd.f32 %v885, %v918
    %v923 = vadd.f32 %v886, %v919
    %v924 = vadd.f32 %v887, %v920
    %v925 = vadd.f32 %v888, %v921
    %926 = vrot.lane.b32.xlu0 %v834, 15
    %v927 = vpop.permute.xlu0 %926
    %928 = vrot.lane.b32.xlu0 %v836, 15
    %v929 = vpop.permute.xlu0 %928
    %932 = vrot.lane.b32.xlu0 %v833, 15
    %v933 = vpop.permute.xlu0 %932
    %934 = vrot.lane.b32.xlu0 %v835, 15
    %v935 = vpop.permute.xlu0 %934
    %vm936 = vcmask 121856
    %v937 = vsel %vm936, %v933, %v927
    %v938 = vsel %vm936, %v935, %v929
    %v943 = vsel %vm936, %v927, %v933
    %v944 = vsel %vm936, %v929, %v935
    %vm945 = vcmp.lt.s32.totalorder %v840, 15
    %vm946 = vcmp.lt.s32.totalorder %v841, 15
    %vm947 = vmand %vm865, %vm945
    %vm948 = vmand %vm866, %vm946
    %v949 = vsel %vm947, %v943, 0.0
    %v950 = vsel %vm948, %v937, 0.0
    %v951 = vsel %vm947, %v944, 0.0
    %v952 = vsel %vm948, %v938, 0.0
    %s953 = scalar_lea.vmem %s10, 16
    %v954 = vld [vmem:[%s953] sm:$0xff]
    %956 = vset.pattern.permute.xlu0 0
    %957 = vperm.xlu0 %956, %v954
    %v958 = vpop.permute.xlu0 %957
    %v960 = vmul.f32 %v958, %v949
    %v961 = vmul.f32 %v958, %v950
    %v962 = vmul.f32 %v958, %v951
    %v963 = vmul.f32 %v958, %v952
    %v964 = vadd.f32 %v922, %v960
    %v965 = vadd.f32 %v923, %v961
    %v966 = vadd.f32 %v924, %v962
    %v967 = vadd.f32 %v925, %v963
    %968 = vrot.lane.b32.xlu0 %v834, 1
    %v969 = vpop.permute.xlu0 %968
    %970 = vrot.lane.b32.xlu0 %v836, 1
    %v971 = vpop.permute.xlu0 %970
    %974 = vrot.lane.b32.xlu0 %v833, 1
    %v975 = vpop.permute.xlu0 %974
    %976 = vrot.lane.b32.xlu0 %v835, 1
    %v977 = vpop.permute.xlu0 %976
    %vm978 = vcmask 7168
    %v979 = vsel %vm978, %v975, %v969
    %v980 = vsel %vm978, %v977, %v971
    %v985 = vsel %vm978, %v969, %v975
    %v986 = vsel %vm978, %v971, %v977
    %v987 = vsel %vm867, %v985, 0.0
    %v988 = vsel %vm868, %v979, 0.0
    %v989 = vsel %vm867, %v986, 0.0
    %v990 = vsel %vm868, %v980, 0.0
    %s991 = scalar_lea.vmem %s10, 24
    %v992 = vld [vmem:[%s991] sm:$0xff]
    %994 = vset.pattern.permute.xlu0 0
    %995 = vperm.xlu0 %994, %v992
    %v996 = vpop.permute.xlu0 %995
    %v998 = vmul.f32 %v996, %v987
    %v999 = vmul.f32 %v996, %v988
    %v1000 = vmul.f32 %v996, %v989
    %v1001 = vmul.f32 %v996, %v990
    %v1002 = vadd.f32 %v964, %v998
    %v1003 = vadd.f32 %v965, %v999
    %v1004 = vadd.f32 %v966, %v1000
    %v1005 = vadd.f32 %v967, %v1001
    %s1006 = scalar_lea.vmem %s10, 32
    %v1007 = vld [vmem:[%s1006] sm:$0xff]
    %1009 = vset.pattern.permute.xlu0 0
    %1010 = vperm.xlu0 %1009, %v1007
    %v1011 = vpop.permute.xlu0 %1010
    %v1013 = vmul.f32 %v1011, %v833
    %v1014 = vmul.f32 %v1011, %v834
    %v1015 = vmul.f32 %v1011, %v835
    %v1016 = vmul.f32 %v1011, %v836
    %v1017 = vadd.f32 %v1002, %v1013
    %v1018 = vadd.f32 %v1003, %v1014
    %v1019 = vadd.f32 %v1004, %v1015
    %v1020 = vadd.f32 %v1005, %v1016
    %1021 = vrot.lane.b32.xlu0 %v833, 127
    %v1022 = vpop.permute.xlu0 %1021
    %1023 = vrot.lane.b32.xlu0 %v834, 127
    %v1024 = vpop.permute.xlu0 %1023
    %1025 = vrot.lane.b32.xlu0 %v835, 127
    %v1026 = vpop.permute.xlu0 %1025
    %1027 = vrot.lane.b32.xlu0 %v836, 127
    %v1028 = vpop.permute.xlu0 %1027
    %vm1029 = vcmask 1039360
    %v1030 = vsel %vm1029, %v1022, %v1024
    %v1031 = vsel %vm1029, %v1026, %v1028
    %v1038 = vsel %vm1029, %v1024, %v1022
    %v1039 = vsel %vm1029, %v1028, %v1026
    %v1040 = vsel %vm945, %v1030, 0.0
    %v1041 = vsel %vm946, %v1038, 0.0
    %v1042 = vsel %vm945, %v1031, 0.0
    %v1043 = vsel %vm946, %v1039, 0.0
    %s1044 = scalar_lea.vmem %s10, 40
    %v1045 = vld [vmem:[%s1044] sm:$0xff]
    %1047 = vset.pattern.permute.xlu0 0
    %1048 = vperm.xlu0 %1047, %v1045
    %v1049 = vpop.permute.xlu0 %1048
    %v1051 = vmul.f32 %v1049, %v1040
    %v1052 = vmul.f32 %v1049, %v1041
    %v1053 = vmul.f32 %v1049, %v1042
    %v1054 = vmul.f32 %v1049, %v1043
    %v1055 = vadd.f32 %v1017, %v1051
    %v1056 = vadd.f32 %v1018, %v1052
    %v1057 = vadd.f32 %v1019, %v1053
    %v1058 = vadd.f32 %v1020, %v1054
    %1059 = vrot.lane.b32.xlu0 %v833, 113
    %v1060 = vpop.permute.xlu0 %1059
    %1061 = vrot.lane.b32.xlu0 %v834, 113
    %v1062 = vpop.permute.xlu0 %1061
    %1063 = vrot.lane.b32.xlu0 %v835, 113
    %v1064 = vpop.permute.xlu0 %1063
    %1065 = vrot.lane.b32.xlu0 %v836, 113
    %v1066 = vpop.permute.xlu0 %1065
    %vm1067 = vcmask 924672
    %v1068 = vsel %vm1067, %v1060, %v1062
    %v1069 = vsel %vm1067, %v1064, %v1066
    %v1076 = vsel %vm1067, %v1062, %v1060
    %v1077 = vsel %vm1067, %v1066, %v1064
    %vm1078 = vcmp.lt.s32.totalorder %v838, 240
    %vm1079 = vcmp.lt.s32.totalorder %v839, 240
    %vm1080 = vmand %vm1078, %vm867
    %vm1081 = vmand %vm1079, %vm868
    %v1082 = vsel %vm1080, %v1068, 0.0
    %v1083 = vsel %vm1081, %v1076, 0.0
    %v1084 = vsel %vm1080, %v1069, 0.0
    %v1085 = vsel %vm1081, %v1077, 0.0
    %s1086 = scalar_lea.vmem %s10, 48
    %v1087 = vld [vmem:[%s1086] sm:$0xff]
    %1089 = vset.pattern.permute.xlu0 0
    %1090 = vperm.xlu0 %1089, %v1087
    %v1091 = vpop.permute.xlu0 %1090
    %v1093 = vmul.f32 %v1091, %v1082
    %v1094 = vmul.f32 %v1091, %v1083
    %v1095 = vmul.f32 %v1091, %v1084
    %v1096 = vmul.f32 %v1091, %v1085
    %v1097 = vadd.f32 %v1055, %v1093
    %v1098 = vadd.f32 %v1056, %v1094
    %v1099 = vadd.f32 %v1057, %v1095
    %v1100 = vadd.f32 %v1058, %v1096
    %1101 = vrot.lane.b32.xlu0 %v833, 112
    %v1102 = vpop.permute.xlu0 %1101
    %1103 = vrot.lane.b32.xlu0 %v834, 112
    %v1104 = vpop.permute.xlu0 %1103
    %1105 = vrot.lane.b32.xlu0 %v835, 112
    %v1106 = vpop.permute.xlu0 %1105
    %1107 = vrot.lane.b32.xlu0 %v836, 112
    %v1108 = vpop.permute.xlu0 %1107
    %vm1109 = vcmask 916480
    %v1110 = vsel %vm1109, %v1102, %v1104
    %v1111 = vsel %vm1109, %v1106, %v1108
    %v1118 = vsel %vm1109, %v1104, %v1102
    %v1119 = vsel %vm1109, %v1108, %v1106
    %v1120 = vsel %vm1078, %v1110, 0.0
    %v1121 = vsel %vm1079, %v1118, 0.0
    %v1122 = vsel %vm1078, %v1111, 0.0
    %v1123 = vsel %vm1079, %v1119, 0.0
    %s1124 = scalar_lea.vmem %s10, 56
    %v1125 = vld [vmem:[%s1124] sm:$0xff]
    %1127 = vset.pattern.permute.xlu0 0
    %1128 = vperm.xlu0 %1127, %v1125
    %v1129 = vpop.permute.xlu0 %1128
    %v1131 = vmul.f32 %v1129, %v1120
    %v1132 = vmul.f32 %v1129, %v1121
    %v1133 = vmul.f32 %v1129, %v1122
    %v1134 = vmul.f32 %v1129, %v1123
    %v1135 = vadd.f32 %v1097, %v1131
    %v1136 = vadd.f32 %v1098, %v1132
    %v1137 = vadd.f32 %v1099, %v1133
    %v1138 = vadd.f32 %v1100, %v1134
    %1139 = vrot.lane.b32.xlu0 %v833, 111
    %v1140 = vpop.permute.xlu0 %1139
    %1141 = vrot.lane.b32.xlu0 %v834, 111
    %v1142 = vpop.permute.xlu0 %1141
    %1143 = vrot.lane.b32.xlu0 %v835, 111
    %v1144 = vpop.permute.xlu0 %1143
    %1145 = vrot.lane.b32.xlu0 %v836, 111
    %v1146 = vpop.permute.xlu0 %1145
    %vm1147 = vcmask 908288
    %v1148 = vsel %vm1147, %v1140, %v1142
    %v1149 = vsel %vm1147, %v1144, %v1146
    %v1156 = vsel %vm1147, %v1142, %v1140
    %v1157 = vsel %vm1147, %v1146, %v1144
    %vm1158 = vmand %vm1078, %vm945
    %vm1159 = vmand %vm1079, %vm946
    %v1160 = vsel %vm1158, %v1148, 0.0
    %v1161 = vsel %vm1159, %v1156, 0.0
    %v1162 = vsel %vm1158, %v1149, 0.0
    %v1163 = vsel %vm1159, %v1157, 0.0
    %s1164 = scalar_lea.vmem %s10, 64
    %v1165 = vld [vmem:[%s1164] sm:$0xff]
    %1167 = vset.pattern.permute.xlu0 0
    %1168 = vperm.xlu0 %1167, %v1165
    %v1169 = vpop.permute.xlu0 %1168
    %v1171 = vmul.f32 %v1169, %v1160
    %v1172 = vmul.f32 %v1169, %v1161
    %v1173 = vmul.f32 %v1169, %v1162
    %v1174 = vmul.f32 %v1169, %v1163
    %v1175 = vadd.f32 %v1135, %v1171
    %v1176 = vadd.f32 %v1136, %v1172
    %v1177 = vadd.f32 %v1137, %v1173
    %v1178 = vadd.f32 %v1138, %v1174
    %v1179 = vld [vmem:[%s11] sm:$0xff]
    %1181 = vset.pattern.permute.xlu0 0
    %1182 = vperm.xlu0 %1181, %v1179
    %v1183 = vpop.permute.xlu0 %1182
    %v1185 = vadd.f32 %v1175, %v1183
    %v1186 = vadd.f32 %v1176, %v1183
    %v1187 = vadd.f32 %v1177, %v1183
    %v1188 = vadd.f32 %v1178, %v1183
    %v1189 = vld [vmem:[%s12] sm:$0xff]
    %v1190 = vld [vmem:[%s13] sm:$0xff]
    %v1191 = vadd.f32 %v1185, %v1186
    %1192 = vadd.xlane.f32.xlu0 %v1191
    %v1193 = vpop.xlane.xlu0 %1192
    %v1194 = vadd.f32 %v1187, %v1188
    %1195 = vadd.xlane.f32.xlu0 %v1194
    %v1196 = vpop.xlane.xlu0 %1195
    %v1197 = vadd.f32 %v1193, %v1196
    %v1198 = vmul.f32 %v1185, %v1185
    %v1199 = vmul.f32 %v1186, %v1186
    %v1200 = vmul.f32 %v1187, %v1187
    %v1201 = vmul.f32 %v1188, %v1188
    %v1202 = vadd.f32 %v1198, %v1199
    %1203 = vadd.xlane.f32.xlu0 %v1202
    %v1204 = vpop.xlane.xlu0 %1203
    %v1205 = vadd.f32 %v1200, %v1201
    %1206 = vadd.xlane.f32.xlu0 %v1205
    %v1207 = vpop.xlane.xlu0 %1206
    %v1208 = vadd.f32 %v1204, %v1207
    %v1209 = vmul.f32 %v1197, 0.001953125
    %v1210 = vmul.f32 %v1208, 0.001953125
    %v1211 = vmul.f32 %v1209, %v1209
    %v1212 = vsub.f32 %v1210, %v1211
    %v1213 = vadd.f32 %v1212, 1e-05
    %v1214 = vrsqrt.pop %v1213
    %v1215 = vsub.f32 %v1185, %v1209
    %v1216 = vsub.f32 %v1186, %v1209
    %v1217 = vsub.f32 %v1187, %v1209
    %v1218 = vsub.f32 %v1188, %v1209
    %v1219 = vmul.f32 %v1214, %v1189
    %1221 = vset.pattern.permute.xlu0 0
    %1222 = vperm.xlu0 %1221, %v1219
    %v1223 = vpop.permute.xlu0 %1222
    %v1225 = vmul.f32 %v1215, %v1223
    %v1226 = vmul.f32 %v1216, %v1223
    %v1227 = vmul.f32 %v1217, %v1223
    %v1228 = vmul.f32 %v1218, %v1223
    %1230 = vset.pattern.permute.xlu0 0
    %1231 = vperm.xlu0 %1230, %v1190
    %v1232 = vpop.permute.xlu0 %1231
    %v1234 = vadd.f32 %v1225, %v1232
    %v1235 = vadd.f32 %v1226, %v1232
    %v1236 = vadd.f32 %v1227, %v1232
    %v1237 = vadd.f32 %v1228, %v1232
    %v1238 = vld [vmem:[%s0] sm:$0xff]
    %v1239 = vld [vmem:[%s0 + $0x8] sm:$0xff]
    %v1240 = vld [vmem:[%s0 + $0x10] sm:$0xff]
    %v1241 = vld [vmem:[%s0 + $0x18] sm:$0xff]
    %v1242 = vadd.f32 %v1234, %v1238
    %v1243 = vadd.f32 %v1235, %v1239
    %v1244 = vadd.f32 %v1236, %v1240
    %v1245 = vadd.f32 %v1237, %v1241
    %v1246 = vmul.f32 %v1242, 0.5
    %v1247 = vmul.f32 %v1243, 0.5
    %v1248 = vmul.f32 %v1244, 0.5
    %v1249 = vmul.f32 %v1245, 0.5
    %v1250 = vmul.f32 %v1242, 0.70710677
    %v1251 = vmul.f32 %v1243, 0.70710677
    %v1252 = vmul.f32 %v1244, 0.70710677
    %v1253 = vmul.f32 %v1245, 0.70710677
    %v1254 = verf.f32.pop %v1250
    %v1255 = verf.f32.pop %v1251
    %v1256 = verf.f32.pop %v1252
    %v1257 = verf.f32.pop %v1253
    %v1258 = vadd.f32 %v1254, 1.0
    %v1259 = vadd.f32 %v1255, 1.0
    %v1260 = vadd.f32 %v1256, 1.0
    %v1261 = vadd.f32 %v1257, 1.0
    %v1262 = vmul.f32 %v1246, %v1258
    %v1263 = vmul.f32 %v1247, %v1259
    %v1264 = vmul.f32 %v1248, %v1260
    %v1265 = vmul.f32 %v1249, %v1261
    %1266 = vst [vmem:[#allocation3] sm:$0xff] %v1262
    %1267 = vst [vmem:[#allocation3 + $0x8] sm:$0xff] %v1263
    %1268 = vst [vmem:[#allocation3 + $0x10] sm:$0xff] %v1264
    %1269 = vst [vmem:[#allocation3 + $0x18] sm:$0xff] %v1265
    // Predicated region
    $region58: #{tpu_custom_call.1} parent=1 // pred_check
      _
    $region59: #{tpu_custom_call.1} parent=1 // pred_check_branch
      %1271 = sbr.rel (0) target = $region61
    $region60: #{tpu_custom_call.1} parent=1 // pred_region
      %s1273 = ssub.s32 512, 512
      %1274 = vsyncadd [#allocation4], %s1273
      %s1275 = sshll.u32 [#allocation3], 4
      %s1276 = int_to_ptr.vmem [resolvable:$true] %s1275
      %1281 = dma.vmem_to_hbm [thread:$0]  %s1276, 512, %s14, [#allocation4], 256, 256, 16
    $region61: #{tpu_custom_call.1} parent=1 // pred_fallthru
      _
    // Predicated region
    $region62: #{tpu_custom_call.1} parent=1 // pred_check
      _
    $region63: #{tpu_custom_call.1} parent=1 // pred_check_branch
      %1283 = sbr.rel (0) target = $region65
    $region64: #{tpu_custom_call.1} parent=1 // pred_region
      %1284 = dma.done [#allocation4], 512
    $region65: #{tpu_custom_call.1} parent=1 // pred_fallthru
      _
    %1285 = vsyncpa [#allocation4], 1

</llo_original>
